<compile_context>
chip_gen: v7x
topology: tpu7x:2x2x1
jax: 0.10.0
libtpu: 0.0.40
codegen_flags: <defaults>
</compile_context>

<pallas_src>
import functools

import jax
import jax.numpy as jnp
from jax.experimental import pallas as pl
from jax.experimental.pallas import tpu as pltpu

_LANES = 128


def _edge_feat_kernel(x1_ref, x2_ref, x3_ref,
                      w1_ref, b1_ref, wp1_ref, wn1_ref,
                      w2_ref, b2_ref, wp2_ref, wn2_ref,
                      w3_ref, b3_ref, wp3_ref, wn3_ref,
                      bm_ref, o_ref):
    cin = x1_ref.shape[1]
    c = b1_ref.shape[0]
    rows = o_ref.shape[2]           # tile rows (static)
    lanes = o_ref.shape[3]          # 128

    # Strip-mine the tile so the per-strip vreg working set stays small
    # (4 input planes + z + acc per 16-row strip ~ 14-16 vregs, no spills).
    if rows % 16 == 0:
        strip = 16
    elif rows % 8 == 0:
        strip = 8
    else:
        strip = rows
    n_strips = rows // strip

    def do_strip(si):
        r0 = si * strip
        if not isinstance(r0, int):
            r0 = pl.multiple_of(r0, strip)

        # Merge-conv bias seeds the accumulator.
        acc = jnp.full((strip, lanes), bm_ref[0], dtype=jnp.float32)

        def add_branch(acc, x_ref, w_ref, b_ref, wp_ref, wn_ref):
            # Load each input-channel plane of this strip once (lane-dense).
            xs = [x_ref[0, k, pl.ds(r0, strip), :].astype(jnp.float32)
                  for k in range(cin)]
            for j in range(c):
                z = xs[0] * w_ref[0, j]
                for k in range(1, cin):
                    z = z + xs[k] * w_ref[k, j]
                z = z + b_ref[j]
                # PReLU folded with the 1x1 merge-conv weight:
                #   where(z>0, z, a*z) * wm  ==  z * where(z>0, wm, a*wm)
                acc = acc + z * jnp.where(z > 0, wp_ref[j], wn_ref[j])
            return acc

        acc = add_branch(acc, x1_ref, w1_ref, b1_ref, wp1_ref, wn1_ref)
        acc = add_branch(acc, x2_ref, w2_ref, b2_ref, wp2_ref, wn2_ref)
        acc = add_branch(acc, x3_ref, w3_ref, b3_ref, wp3_ref, wn3_ref)

        o_ref[0, 0, pl.ds(r0, strip), :] = acc.astype(o_ref.dtype)

    if n_strips == 1:
        do_strip(0)
    else:
        @pl.loop(0, n_strips)
        def _(si):
            do_strip(si)


def edge_featlayer_3(x1, x2, x3, params, *, rows_per_tile=512):
    """x1, x2, x3: (N, Cin, H, W).  Returns (N, 1, H, W) float32."""
    N, Cin, H, W = x1.shape
    S = H * W
    # Spatial axis padded up to a lane multiple (only copies if needed).
    Sp = pl.cdiv(S, _LANES) * _LANES
    R = Sp // _LANES

    def prep(x):
        xm = x.reshape(N, Cin, S)
        if Sp != S:
            # TODO(synk): for repeated calls with S % 128 != 0, pad once and
            # reuse padded buffers upstream to avoid the extra HBM round trip.
            xm = jnp.pad(xm, ((0, 0), (0, 0), (0, Sp - S)))
        return xm.reshape(N, Cin, R, _LANES)     # free, contiguous reshape

    x1m, x2m, x3m = prep(x1), prep(x2), prep(x3)

    # Tile rows: multiple of 8 (sublane tiling) or the full extent.
    if R >= 8:
        rt = max(8, (min(rows_per_tile, R) // 8) * 8)
        # Keep the grid at >= 4 steps when possible so v7x's 2 TensorCores
        # both get work (dimension_semantics are "parallel").
        while rt > 8 and N * pl.cdiv(R, rt) < 4:
            rt = max(8, ((rt // 2) // 8) * 8)
    else:
        rt = R
    grid = (N, pl.cdiv(R, rt))

    # Double-buffered f32 VMEM footprint: 3 inputs x Cin planes + 1 output.
    vmem_bytes = (3 * Cin + 1) * 2 * rt * _LANES * 4
    vmem_limit = None
    if vmem_bytes > 24 * 1024 * 1024:
        vmem_limit = min(64 * 1024 * 1024, int(vmem_bytes * 1.3))

    f32 = jnp.float32

    def fold(wm, a):
        wm = wm.astype(f32)
        return wm, a.astype(f32)[0] * wm       # (wm, alpha*wm), trace-time

    wp1, wn1 = fold(params["wm1"], params["a1"])
    wp2, wn2 = fold(params["wm2"], params["a2"])
    wp3, wn3 = fold(params["wm3"], params["a3"])

    x_spec = pl.BlockSpec((1, Cin, rt, _LANES), lambda n, s: (n, 0, s, 0))
    smem_spec = pl.BlockSpec(memory_space=pltpu.MemorySpace.SMEM)

    out = pl.pallas_call(
        _edge_feat_kernel,
        out_shape=jax.ShapeDtypeStruct((N, 1, R, _LANES), jnp.float32),
        grid=grid,
        in_specs=[x_spec, x_spec, x_spec] + [smem_spec] * 13,
        out_specs=pl.BlockSpec((1, 1, rt, _LANES), lambda n, s: (n, 0, s, 0)),
        compiler_params=pltpu.CompilerParams(
            dimension_semantics=("parallel", "parallel"),
            vmem_limit_bytes=vmem_limit),
    )(x1m, x2m, x3m,
      params["w1"].astype(f32), params["b1"].astype(f32), wp1, wn1,
      params["w2"].astype(f32), params["b2"].astype(f32), wp2, wn2,
      params["w3"].astype(f32), params["b3"].astype(f32), wp3, wn3,
      params["bm"].astype(f32))

    out = out.reshape(N, 1, Sp)
    if Sp != S:
        out = out[:, :, :S]
    return out.reshape(N, 1, H, W)


def init_params(key, in_channel, channel):
    ks = jax.random.split(key, 8)
    scale = 0.1

    def nrm(k, shape):
        return scale * jax.random.normal(k, shape, jnp.float32)

    wm = nrm(ks[6], (3 * channel,))
    return {
        "w1": nrm(ks[0], (in_channel, channel)), "b1": nrm(ks[1], (channel,)),
        "w2": nrm(ks[2], (in_channel, channel)), "b2": nrm(ks[3], (channel,)),
        "w3": nrm(ks[4], (in_channel, channel)), "b3": nrm(ks[5], (channel,)),
        # nn.PReLU() default: single shared alpha initialized to 0.25
        "a1": jnp.full((1,), 0.25, jnp.float32),
        "a2": jnp.full((1,), 0.25, jnp.float32),
        "a3": jnp.full((1,), 0.25, jnp.float32),
        "wm1": wm[:channel], "wm2": wm[channel:2 * channel],
        "wm3": wm[2 * channel:],
        "bm": nrm(ks[7], (1,)),
    }


def _reference(x1, x2, x3, p):
    """Pure-JAX reference matching the PyTorch module semantics (NCHW)."""
    def branch(x, w, b, a):
        y = jnp.einsum("nchw,cd->ndhw", x, w) + b.reshape(1, -1, 1, 1)
        return jnp.where(y > 0, y, a[0] * y)

    y1 = branch(x1, p["w1"], p["b1"], p["a1"])
    y2 = branch(x2, p["w2"], p["b2"], p["a2"])
    y3 = branch(x3, p["w3"], p["b3"], p["a3"])
    ycat = jnp.concatenate([y1, y2, y3], axis=1)
    wm = jnp.concatenate([p["wm1"], p["wm2"], p["wm3"]], axis=0).reshape(-1, 1)
    return jnp.einsum("nchw,cd->ndhw", ycat, wm) + p["bm"][0]


if __name__ == "__main__":
    key = jax.random.PRNGKey(0)
    k1, k2, k3, kp = jax.random.split(key, 4)

    N, Cin, H, W = 2, 4, 16, 16
    channel = 8

    x1 = jax.random.normal(k1, (N, Cin, H, W), jnp.float32)
    x2 = jax.random.normal(k2, (N, Cin, H, W), jnp.float32)
    x3 = jax.random.normal(k3, (N, Cin, H, W), jnp.float32)
    params = init_params(kp, Cin, channel)

    fn = jax.jit(functools.partial(edge_featlayer_3))
    out = jax.block_until_ready(fn(x1, x2, x3, params))

    ref = _reference(x1, x2, x3, params)
    assert out.shape == (N, 1, H, W)
    assert jnp.allclose(out, ref, atol=1e-5, rtol=1e-5), "mismatch vs reference"

    print("KERNEL_OK")
</pallas_src>

<mosaic_0001>
module attributes {stable_mosaic.version = 11 : i64} {
  func.func @_edge_feat_kernel(%arg0: i32, %arg1: i32, %arg2: memref<1x4x2x128xf32, #tpu.memory_space<vmem>>, %arg3: memref<1x4x2x128xf32, #tpu.memory_space<vmem>>, %arg4: memref<1x4x2x128xf32, #tpu.memory_space<vmem>>, %arg5: memref<4x8xf32, #tpu.memory_space<smem>>, %arg6: memref<8xf32, #tpu.memory_space<smem>>, %arg7: memref<8xf32, #tpu.memory_space<smem>>, %arg8: memref<8xf32, #tpu.memory_space<smem>>, %arg9: memref<4x8xf32, #tpu.memory_space<smem>>, %arg10: memref<8xf32, #tpu.memory_space<smem>>, %arg11: memref<8xf32, #tpu.memory_space<smem>>, %arg12: memref<8xf32, #tpu.memory_space<smem>>, %arg13: memref<4x8xf32, #tpu.memory_space<smem>>, %arg14: memref<8xf32, #tpu.memory_space<smem>>, %arg15: memref<8xf32, #tpu.memory_space<smem>>, %arg16: memref<8xf32, #tpu.memory_space<smem>>, %arg17: memref<1xf32, #tpu.memory_space<smem>>, %arg18: memref<1x1x2x128xf32, #tpu.memory_space<vmem>>) attributes {dimension_semantics = [#tpu.dimension_semantics<parallel>, #tpu.dimension_semantics<parallel>], iteration_bounds = array<i64: 2, 1>, scalar_prefetch = 0 : i64, scratch_operands = 0 : i64, tpu.core_type = #tpu.core_type<tc>, window_params = [{transform_indices = @transform_0, window_bounds = array<i64: 1, 4, 2, 128>}, {transform_indices = @transform_1, window_bounds = array<i64: 1, 4, 2, 128>}, {transform_indices = @transform_2, window_bounds = array<i64: 1, 4, 2, 128>}, {transform_indices = @transform_3, window_bounds = array<i64: 4, 8>}, {transform_indices = @transform_4, window_bounds = array<i64: 8>}, {transform_indices = @transform_5, window_bounds = array<i64: 8>}, {transform_indices = @transform_6, window_bounds = array<i64: 8>}, {transform_indices = @transform_7, window_bounds = array<i64: 4, 8>}, {transform_indices = @transform_8, window_bounds = array<i64: 8>}, {transform_indices = @transform_9, window_bounds = array<i64: 8>}, {transform_indices = @transform_10, window_bounds = array<i64: 8>}, {transform_indices = @transform_11, window_bounds = array<i64: 4, 8>}, {transform_indices = @transform_12, window_bounds = array<i64: 8>}, {transform_indices = @transform_13, window_bounds = array<i64: 8>}, {transform_indices = @transform_14, window_bounds = array<i64: 8>}, {transform_indices = @transform_15, window_bounds = array<i64: 1>}, {transform_indices = @transform_16, window_bounds = array<i64: 1, 1, 2, 128>}]} {
    %c0 = arith.constant 0 : index
    %0 = memref.load %arg17[%c0] : memref<1xf32, #tpu.memory_space<smem>>
    %1 = vector.broadcast %0 : f32 to vector<2x128xf32>
    %c0_0 = arith.constant 0 : index
    %c0_1 = arith.constant 0 : index
    %c0_2 = arith.constant 0 : index
    %c0_3 = arith.constant 0 : index
    %2 = vector.load %arg2[%c0_0, %c0_1, %c0_2, %c0_3] : memref<1x4x2x128xf32, #tpu.memory_space<vmem>>, vector<1x1x2x128xf32>
    %3 = vector.shape_cast %2 : vector<1x1x2x128xf32> to vector<2x128xf32>
    %c0_4 = arith.constant 0 : index
    %c1 = arith.constant 1 : index
    %c0_5 = arith.constant 0 : index
    %c0_6 = arith.constant 0 : index
    %4 = vector.load %arg2[%c0_4, %c1, %c0_5, %c0_6] : memref<1x4x2x128xf32, #tpu.memory_space<vmem>>, vector<1x1x2x128xf32>
    %5 = vector.shape_cast %4 : vector<1x1x2x128xf32> to vector<2x128xf32>
    %c0_7 = arith.constant 0 : index
    %c2 = arith.constant 2 : index
    %c0_8 = arith.constant 0 : index
    %c0_9 = arith.constant 0 : index
    %6 = vector.load %arg2[%c0_7, %c2, %c0_8, %c0_9] : memref<1x4x2x128xf32, #tpu.memory_space<vmem>>, vector<1x1x2x128xf32>
    %7 = vector.shape_cast %6 : vector<1x1x2x128xf32> to vector<2x128xf32>
    %c0_10 = arith.constant 0 : index
    %c3 = arith.constant 3 : index
    %c0_11 = arith.constant 0 : index
    %c0_12 = arith.constant 0 : index
    %8 = vector.load %arg2[%c0_10, %c3, %c0_11, %c0_12] : memref<1x4x2x128xf32, #tpu.memory_space<vmem>>, vector<1x1x2x128xf32>
    %9 = vector.shape_cast %8 : vector<1x1x2x128xf32> to vector<2x128xf32>
    %c0_13 = arith.constant 0 : index
    %c0_14 = arith.constant 0 : index
    %10 = memref.load %arg5[%c0_13, %c0_14] : memref<4x8xf32, #tpu.memory_space<smem>>
    %11 = vector.broadcast %10 : f32 to vector<2x128xf32>
    %12 = arith.mulf %3, %11 : vector<2x128xf32>
    %c1_15 = arith.constant 1 : index
    %c0_16 = arith.constant 0 : index
    %13 = memref.load %arg5[%c1_15, %c0_16] : memref<4x8xf32, #tpu.memory_space<smem>>
    %14 = vector.broadcast %13 : f32 to vector<2x128xf32>
    %15 = arith.mulf %5, %14 : vector<2x128xf32>
    %16 = arith.addf %12, %15 : vector<2x128xf32>
    %c2_17 = arith.constant 2 : index
    %c0_18 = arith.constant 0 : index
    %17 = memref.load %arg5[%c2_17, %c0_18] : memref<4x8xf32, #tpu.memory_space<smem>>
    %18 = vector.broadcast %17 : f32 to vector<2x128xf32>
    %19 = arith.mulf %7, %18 : vector<2x128xf32>
    %20 = arith.addf %16, %19 : vector<2x128xf32>
    %c3_19 = arith.constant 3 : index
    %c0_20 = arith.constant 0 : index
    %21 = memref.load %arg5[%c3_19, %c0_20] : memref<4x8xf32, #tpu.memory_space<smem>>
    %22 = vector.broadcast %21 : f32 to vector<2x128xf32>
    %23 = arith.mulf %9, %22 : vector<2x128xf32>
    %24 = arith.addf %20, %23 : vector<2x128xf32>
    %c0_21 = arith.constant 0 : index
    %25 = memref.load %arg6[%c0_21] : memref<8xf32, #tpu.memory_space<smem>>
    %26 = vector.broadcast %25 : f32 to vector<2x128xf32>
    %27 = arith.addf %24, %26 : vector<2x128xf32>
    %cst = arith.constant 0.000000e+00 : f32
    %28 = vector.broadcast %cst : f32 to vector<2x128xf32>
    %29 = arith.cmpf ogt, %27, %28 : vector<2x128xf32>
    %c0_22 = arith.constant 0 : index
    %30 = memref.load %arg7[%c0_22] : memref<8xf32, #tpu.memory_space<smem>>
    %c0_23 = arith.constant 0 : index
    %31 = memref.load %arg8[%c0_23] : memref<8xf32, #tpu.memory_space<smem>>
    %32 = vector.broadcast %30 : f32 to vector<2x128xf32>
    %33 = vector.broadcast %31 : f32 to vector<2x128xf32>
    %34 = arith.select %29, %32, %33 : vector<2x128xi1>, vector<2x128xf32>
    %35 = arith.mulf %27, %34 : vector<2x128xf32>
    %36 = arith.addf %1, %35 : vector<2x128xf32>
    %c0_24 = arith.constant 0 : index
    %c1_25 = arith.constant 1 : index
    %37 = memref.load %arg5[%c0_24, %c1_25] : memref<4x8xf32, #tpu.memory_space<smem>>
    %38 = vector.broadcast %37 : f32 to vector<2x128xf32>
    %39 = arith.mulf %3, %38 : vector<2x128xf32>
    %c1_26 = arith.constant 1 : index
    %c1_27 = arith.constant 1 : index
    %40 = memref.load %arg5[%c1_26, %c1_27] : memref<4x8xf32, #tpu.memory_space<smem>>
    %41 = vector.broadcast %40 : f32 to vector<2x128xf32>
    %42 = arith.mulf %5, %41 : vector<2x128xf32>
    %43 = arith.addf %39, %42 : vector<2x128xf32>
    %c2_28 = arith.constant 2 : index
    %c1_29 = arith.constant 1 : index
    %44 = memref.load %arg5[%c2_28, %c1_29] : memref<4x8xf32, #tpu.memory_space<smem>>
    %45 = vector.broadcast %44 : f32 to vector<2x128xf32>
    %46 = arith.mulf %7, %45 : vector<2x128xf32>
    %47 = arith.addf %43, %46 : vector<2x128xf32>
    %c3_30 = arith.constant 3 : index
    %c1_31 = arith.constant 1 : index
    %48 = memref.load %arg5[%c3_30, %c1_31] : memref<4x8xf32, #tpu.memory_space<smem>>
    %49 = vector.broadcast %48 : f32 to vector<2x128xf32>
    %50 = arith.mulf %9, %49 : vector<2x128xf32>
    %51 = arith.addf %47, %50 : vector<2x128xf32>
    %c1_32 = arith.constant 1 : index
    %52 = memref.load %arg6[%c1_32] : memref<8xf32, #tpu.memory_space<smem>>
    %53 = vector.broadcast %52 : f32 to vector<2x128xf32>
    %54 = arith.addf %51, %53 : vector<2x128xf32>
    %cst_33 = arith.constant 0.000000e+00 : f32
    %55 = vector.broadcast %cst_33 : f32 to vector<2x128xf32>
    %56 = arith.cmpf ogt, %54, %55 : vector<2x128xf32>
    %c1_34 = arith.constant 1 : index
    %57 = memref.load %arg7[%c1_34] : memref<8xf32, #tpu.memory_space<smem>>
    %c1_35 = arith.constant 1 : index
    %58 = memref.load %arg8[%c1_35] : memref<8xf32, #tpu.memory_space<smem>>
    %59 = vector.broadcast %57 : f32 to vector<2x128xf32>
    %60 = vector.broadcast %58 : f32 to vector<2x128xf32>
    %61 = arith.select %56, %59, %60 : vector<2x128xi1>, vector<2x128xf32>
    %62 = arith.mulf %54, %61 : vector<2x128xf32>
    %63 = arith.addf %36, %62 : vector<2x128xf32>
    %c0_36 = arith.constant 0 : index
    %c2_37 = arith.constant 2 : index
    %64 = memref.load %arg5[%c0_36, %c2_37] : memref<4x8xf32, #tpu.memory_space<smem>>
    %65 = vector.broadcast %64 : f32 to vector<2x128xf32>
    %66 = arith.mulf %3, %65 : vector<2x128xf32>
    %c1_38 = arith.constant 1 : index
    %c2_39 = arith.constant 2 : index
    %67 = memref.load %arg5[%c1_38, %c2_39] : memref<4x8xf32, #tpu.memory_space<smem>>
    %68 = vector.broadcast %67 : f32 to vector<2x128xf32>
    %69 = arith.mulf %5, %68 : vector<2x128xf32>
    %70 = arith.addf %66, %69 : vector<2x128xf32>
    %c2_40 = arith.constant 2 : index
    %c2_41 = arith.constant 2 : index
    %71 = memref.load %arg5[%c2_40, %c2_41] : memref<4x8xf32, #tpu.memory_space<smem>>
    %72 = vector.broadcast %71 : f32 to vector<2x128xf32>
    %73 = arith.mulf %7, %72 : vector<2x128xf32>
    %74 = arith.addf %70, %73 : vector<2x128xf32>
    %c3_42 = arith.constant 3 : index
    %c2_43 = arith.constant 2 : index
    %75 = memref.load %arg5[%c3_42, %c2_43] : memref<4x8xf32, #tpu.memory_space<smem>>
    %76 = vector.broadcast %75 : f32 to vector<2x128xf32>
    %77 = arith.mulf %9, %76 : vector<2x128xf32>
    %78 = arith.addf %74, %77 : vector<2x128xf32>
    %c2_44 = arith.constant 2 : index
    %79 = memref.load %arg6[%c2_44] : memref<8xf32, #tpu.memory_space<smem>>
    %80 = vector.broadcast %79 : f32 to vector<2x128xf32>
    %81 = arith.addf %78, %80 : vector<2x128xf32>
    %cst_45 = arith.constant 0.000000e+00 : f32
    %82 = vector.broadcast %cst_45 : f32 to vector<2x128xf32>
    %83 = arith.cmpf ogt, %81, %82 : vector<2x128xf32>
    %c2_46 = arith.constant 2 : index
    %84 = memref.load %arg7[%c2_46] : memref<8xf32, #tpu.memory_space<smem>>
    %c2_47 = arith.constant 2 : index
    %85 = memref.load %arg8[%c2_47] : memref<8xf32, #tpu.memory_space<smem>>
    %86 = vector.broadcast %84 : f32 to vector<2x128xf32>
    %87 = vector.broadcast %85 : f32 to vector<2x128xf32>
    %88 = arith.select %83, %86, %87 : vector<2x128xi1>, vector<2x128xf32>
    %89 = arith.mulf %81, %88 : vector<2x128xf32>
    %90 = arith.addf %63, %89 : vector<2x128xf32>
    %c0_48 = arith.constant 0 : index
    %c3_49 = arith.constant 3 : index
    %91 = memref.load %arg5[%c0_48, %c3_49] : memref<4x8xf32, #tpu.memory_space<smem>>
    %92 = vector.broadcast %91 : f32 to vector<2x128xf32>
    %93 = arith.mulf %3, %92 : vector<2x128xf32>
    %c1_50 = arith.constant 1 : index
    %c3_51 = arith.constant 3 : index
    %94 = memref.load %arg5[%c1_50, %c3_51] : memref<4x8xf32, #tpu.memory_space<smem>>
    %95 = vector.broadcast %94 : f32 to vector<2x128xf32>
    %96 = arith.mulf %5, %95 : vector<2x128xf32>
    %97 = arith.addf %93, %96 : vector<2x128xf32>
    %c2_52 = arith.constant 2 : index
    %c3_53 = arith.constant 3 : index
    %98 = memref.load %arg5[%c2_52, %c3_53] : memref<4x8xf32, #tpu.memory_space<smem>>
    %99 = vector.broadcast %98 : f32 to vector<2x128xf32>
    %100 = arith.mulf %7, %99 : vector<2x128xf32>
    %101 = arith.addf %97, %100 : vector<2x128xf32>
    %c3_54 = arith.constant 3 : index
    %c3_55 = arith.constant 3 : index
    %102 = memref.load %arg5[%c3_54, %c3_55] : memref<4x8xf32, #tpu.memory_space<smem>>
    %103 = vector.broadcast %102 : f32 to vector<2x128xf32>
    %104 = arith.mulf %9, %103 : vector<2x128xf32>
    %105 = arith.addf %101, %104 : vector<2x128xf32>
    %c3_56 = arith.constant 3 : index
    %106 = memref.load %arg6[%c3_56] : memref<8xf32, #tpu.memory_space<smem>>
    %107 = vector.broadcast %106 : f32 to vector<2x128xf32>
    %108 = arith.addf %105, %107 : vector<2x128xf32>
    %cst_57 = arith.constant 0.000000e+00 : f32
    %109 = vector.broadcast %cst_57 : f32 to vector<2x128xf32>
    %110 = arith.cmpf ogt, %108, %109 : vector<2x128xf32>
    %c3_58 = arith.constant 3 : index
    %111 = memref.load %arg7[%c3_58] : memref<8xf32, #tpu.memory_space<smem>>
    %c3_59 = arith.constant 3 : index
    %112 = memref.load %arg8[%c3_59] : memref<8xf32, #tpu.memory_space<smem>>
    %113 = vector.broadcast %111 : f32 to vector<2x128xf32>
    %114 = vector.broadcast %112 : f32 to vector<2x128xf32>
    %115 = arith.select %110, %113, %114 : vector<2x128xi1>, vector<2x128xf32>
    %116 = arith.mulf %108, %115 : vector<2x128xf32>
    %117 = arith.addf %90, %116 : vector<2x128xf32>
    %c0_60 = arith.constant 0 : index
    %c4 = arith.constant 4 : index
    %118 = memref.load %arg5[%c0_60, %c4] : memref<4x8xf32, #tpu.memory_space<smem>>
    %119 = vector.broadcast %118 : f32 to vector<2x128xf32>
    %120 = arith.mulf %3, %119 : vector<2x128xf32>
    %c1_61 = arith.constant 1 : index
    %c4_62 = arith.constant 4 : index
    %121 = memref.load %arg5[%c1_61, %c4_62] : memref<4x8xf32, #tpu.memory_space<smem>>
    %122 = vector.broadcast %121 : f32 to vector<2x128xf32>
    %123 = arith.mulf %5, %122 : vector<2x128xf32>
    %124 = arith.addf %120, %123 : vector<2x128xf32>
    %c2_63 = arith.constant 2 : index
    %c4_64 = arith.constant 4 : index
    %125 = memref.load %arg5[%c2_63, %c4_64] : memref<4x8xf32, #tpu.memory_space<smem>>
    %126 = vector.broadcast %125 : f32 to vector<2x128xf32>
    %127 = arith.mulf %7, %126 : vector<2x128xf32>
    %128 = arith.addf %124, %127 : vector<2x128xf32>
    %c3_65 = arith.constant 3 : index
    %c4_66 = arith.constant 4 : index
    %129 = memref.load %arg5[%c3_65, %c4_66] : memref<4x8xf32, #tpu.memory_space<smem>>
    %130 = vector.broadcast %129 : f32 to vector<2x128xf32>
    %131 = arith.mulf %9, %130 : vector<2x128xf32>
    %132 = arith.addf %128, %131 : vector<2x128xf32>
    %c4_67 = arith.constant 4 : index
    %133 = memref.load %arg6[%c4_67] : memref<8xf32, #tpu.memory_space<smem>>
    %134 = vector.broadcast %133 : f32 to vector<2x128xf32>
    %135 = arith.addf %132, %134 : vector<2x128xf32>
    %cst_68 = arith.constant 0.000000e+00 : f32
    %136 = vector.broadcast %cst_68 : f32 to vector<2x128xf32>
    %137 = arith.cmpf ogt, %135, %136 : vector<2x128xf32>
    %c4_69 = arith.constant 4 : index
    %138 = memref.load %arg7[%c4_69] : memref<8xf32, #tpu.memory_space<smem>>
    %c4_70 = arith.constant 4 : index
    %139 = memref.load %arg8[%c4_70] : memref<8xf32, #tpu.memory_space<smem>>
    %140 = vector.broadcast %138 : f32 to vector<2x128xf32>
    %141 = vector.broadcast %139 : f32 to vector<2x128xf32>
    %142 = arith.select %137, %140, %141 : vector<2x128xi1>, vector<2x128xf32>
    %143 = arith.mulf %135, %142 : vector<2x128xf32>
    %144 = arith.addf %117, %143 : vector<2x128xf32>
    %c0_71 = arith.constant 0 : index
    %c5 = arith.constant 5 : index
    %145 = memref.load %arg5[%c0_71, %c5] : memref<4x8xf32, #tpu.memory_space<smem>>
    %146 = vector.broadcast %145 : f32 to vector<2x128xf32>
    %147 = arith.mulf %3, %146 : vector<2x128xf32>
    %c1_72 = arith.constant 1 : index
    %c5_73 = arith.constant 5 : index
    %148 = memref.load %arg5[%c1_72, %c5_73] : memref<4x8xf32, #tpu.memory_space<smem>>
    %149 = vector.broadcast %148 : f32 to vector<2x128xf32>
    %150 = arith.mulf %5, %149 : vector<2x128xf32>
    %151 = arith.addf %147, %150 : vector<2x128xf32>
    %c2_74 = arith.constant 2 : index
    %c5_75 = arith.constant 5 : index
    %152 = memref.load %arg5[%c2_74, %c5_75] : memref<4x8xf32, #tpu.memory_space<smem>>
    %153 = vector.broadcast %152 : f32 to vector<2x128xf32>
    %154 = arith.mulf %7, %153 : vector<2x128xf32>
    %155 = arith.addf %151, %154 : vector<2x128xf32>
    %c3_76 = arith.constant 3 : index
    %c5_77 = arith.constant 5 : index
    %156 = memref.load %arg5[%c3_76, %c5_77] : memref<4x8xf32, #tpu.memory_space<smem>>
    %157 = vector.broadcast %156 : f32 to vector<2x128xf32>
    %158 = arith.mulf %9, %157 : vector<2x128xf32>
    %159 = arith.addf %155, %158 : vector<2x128xf32>
    %c5_78 = arith.constant 5 : index
    %160 = memref.load %arg6[%c5_78] : memref<8xf32, #tpu.memory_space<smem>>
    %161 = vector.broadcast %160 : f32 to vector<2x128xf32>
    %162 = arith.addf %159, %161 : vector<2x128xf32>
    %cst_79 = arith.constant 0.000000e+00 : f32
    %163 = vector.broadcast %cst_79 : f32 to vector<2x128xf32>
    %164 = arith.cmpf ogt, %162, %163 : vector<2x128xf32>
    %c5_80 = arith.constant 5 : index
    %165 = memref.load %arg7[%c5_80] : memref<8xf32, #tpu.memory_space<smem>>
    %c5_81 = arith.constant 5 : index
    %166 = memref.load %arg8[%c5_81] : memref<8xf32, #tpu.memory_space<smem>>
    %167 = vector.broadcast %165 : f32 to vector<2x128xf32>
    %168 = vector.broadcast %166 : f32 to vector<2x128xf32>
    %169 = arith.select %164, %167, %168 : vector<2x128xi1>, vector<2x128xf32>
    %170 = arith.mulf %162, %169 : vector<2x128xf32>
    %171 = arith.addf %144, %170 : vector<2x128xf32>
    %c0_82 = arith.constant 0 : index
    %c6 = arith.constant 6 : index
    %172 = memref.load %arg5[%c0_82, %c6] : memref<4x8xf32, #tpu.memory_space<smem>>
    %173 = vector.broadcast %172 : f32 to vector<2x128xf32>
    %174 = arith.mulf %3, %173 : vector<2x128xf32>
    %c1_83 = arith.constant 1 : index
    %c6_84 = arith.constant 6 : index
    %175 = memref.load %arg5[%c1_83, %c6_84] : memref<4x8xf32, #tpu.memory_space<smem>>
    %176 = vector.broadcast %175 : f32 to vector<2x128xf32>
    %177 = arith.mulf %5, %176 : vector<2x128xf32>
    %178 = arith.addf %174, %177 : vector<2x128xf32>
    %c2_85 = arith.constant 2 : index
    %c6_86 = arith.constant 6 : index
    %179 = memref.load %arg5[%c2_85, %c6_86] : memref<4x8xf32, #tpu.memory_space<smem>>
    %180 = vector.broadcast %179 : f32 to vector<2x128xf32>
    %181 = arith.mulf %7, %180 : vector<2x128xf32>
    %182 = arith.addf %178, %181 : vector<2x128xf32>
    %c3_87 = arith.constant 3 : index
    %c6_88 = arith.constant 6 : index
    %183 = memref.load %arg5[%c3_87, %c6_88] : memref<4x8xf32, #tpu.memory_space<smem>>
    %184 = vector.broadcast %183 : f32 to vector<2x128xf32>
    %185 = arith.mulf %9, %184 : vector<2x128xf32>
    %186 = arith.addf %182, %185 : vector<2x128xf32>
    %c6_89 = arith.constant 6 : index
    %187 = memref.load %arg6[%c6_89] : memref<8xf32, #tpu.memory_space<smem>>
    %188 = vector.broadcast %187 : f32 to vector<2x128xf32>
    %189 = arith.addf %186, %188 : vector<2x128xf32>
    %cst_90 = arith.constant 0.000000e+00 : f32
    %190 = vector.broadcast %cst_90 : f32 to vector<2x128xf32>
    %191 = arith.cmpf ogt, %189, %190 : vector<2x128xf32>
    %c6_91 = arith.constant 6 : index
    %192 = memref.load %arg7[%c6_91] : memref<8xf32, #tpu.memory_space<smem>>
    %c6_92 = arith.constant 6 : index
    %193 = memref.load %arg8[%c6_92] : memref<8xf32, #tpu.memory_space<smem>>
    %194 = vector.broadcast %192 : f32 to vector<2x128xf32>
    %195 = vector.broadcast %193 : f32 to vector<2x128xf32>
    %196 = arith.select %191, %194, %195 : vector<2x128xi1>, vector<2x128xf32>
    %197 = arith.mulf %189, %196 : vector<2x128xf32>
    %198 = arith.addf %171, %197 : vector<2x128xf32>
    %c0_93 = arith.constant 0 : index
    %c7 = arith.constant 7 : index
    %199 = memref.load %arg5[%c0_93, %c7] : memref<4x8xf32, #tpu.memory_space<smem>>
    %200 = vector.broadcast %199 : f32 to vector<2x128xf32>
    %201 = arith.mulf %3, %200 : vector<2x128xf32>
    %c1_94 = arith.constant 1 : index
    %c7_95 = arith.constant 7 : index
    %202 = memref.load %arg5[%c1_94, %c7_95] : memref<4x8xf32, #tpu.memory_space<smem>>
    %203 = vector.broadcast %202 : f32 to vector<2x128xf32>
    %204 = arith.mulf %5, %203 : vector<2x128xf32>
    %205 = arith.addf %201, %204 : vector<2x128xf32>
    %c2_96 = arith.constant 2 : index
    %c7_97 = arith.constant 7 : index
    %206 = memref.load %arg5[%c2_96, %c7_97] : memref<4x8xf32, #tpu.memory_space<smem>>
    %207 = vector.broadcast %206 : f32 to vector<2x128xf32>
    %208 = arith.mulf %7, %207 : vector<2x128xf32>
    %209 = arith.addf %205, %208 : vector<2x128xf32>
    %c3_98 = arith.constant 3 : index
    %c7_99 = arith.constant 7 : index
    %210 = memref.load %arg5[%c3_98, %c7_99] : memref<4x8xf32, #tpu.memory_space<smem>>
    %211 = vector.broadcast %210 : f32 to vector<2x128xf32>
    %212 = arith.mulf %9, %211 : vector<2x128xf32>
    %213 = arith.addf %209, %212 : vector<2x128xf32>
    %c7_100 = arith.constant 7 : index
    %214 = memref.load %arg6[%c7_100] : memref<8xf32, #tpu.memory_space<smem>>
    %215 = vector.broadcast %214 : f32 to vector<2x128xf32>
    %216 = arith.addf %213, %215 : vector<2x128xf32>
    %cst_101 = arith.constant 0.000000e+00 : f32
    %217 = vector.broadcast %cst_101 : f32 to vector<2x128xf32>
    %218 = arith.cmpf ogt, %216, %217 : vector<2x128xf32>
    %c7_102 = arith.constant 7 : index
    %219 = memref.load %arg7[%c7_102] : memref<8xf32, #tpu.memory_space<smem>>
    %c7_103 = arith.constant 7 : index
    %220 = memref.load %arg8[%c7_103] : memref<8xf32, #tpu.memory_space<smem>>
    %221 = vector.broadcast %219 : f32 to vector<2x128xf32>
    %222 = vector.broadcast %220 : f32 to vector<2x128xf32>
    %223 = arith.select %218, %221, %222 : vector<2x128xi1>, vector<2x128xf32>
    %224 = arith.mulf %216, %223 : vector<2x128xf32>
    %225 = arith.addf %198, %224 : vector<2x128xf32>
    %c0_104 = arith.constant 0 : index
    %c0_105 = arith.constant 0 : index
    %c0_106 = arith.constant 0 : index
    %c0_107 = arith.constant 0 : index
    %226 = vector.load %arg3[%c0_104, %c0_105, %c0_106, %c0_107] : memref<1x4x2x128xf32, #tpu.memory_space<vmem>>, vector<1x1x2x128xf32>
    %227 = vector.shape_cast %226 : vector<1x1x2x128xf32> to vector<2x128xf32>
    %c0_108 = arith.constant 0 : index
    %c1_109 = arith.constant 1 : index
    %c0_110 = arith.constant 0 : index
    %c0_111 = arith.constant 0 : index
    %228 = vector.load %arg3[%c0_108, %c1_109, %c0_110, %c0_111] : memref<1x4x2x128xf32, #tpu.memory_space<vmem>>, vector<1x1x2x128xf32>
    %229 = vector.shape_cast %228 : vector<1x1x2x128xf32> to vector<2x128xf32>
    %c0_112 = arith.constant 0 : index
    %c2_113 = arith.constant 2 : index
    %c0_114 = arith.constant 0 : index
    %c0_115 = arith.constant 0 : index
    %230 = vector.load %arg3[%c0_112, %c2_113, %c0_114, %c0_115] : memref<1x4x2x128xf32, #tpu.memory_space<vmem>>, vector<1x1x2x128xf32>
    %231 = vector.shape_cast %230 : vector<1x1x2x128xf32> to vector<2x128xf32>
    %c0_116 = arith.constant 0 : index
    %c3_117 = arith.constant 3 : index
    %c0_118 = arith.constant 0 : index
    %c0_119 = arith.constant 0 : index
    %232 = vector.load %arg3[%c0_116, %c3_117, %c0_118, %c0_119] : memref<1x4x2x128xf32, #tpu.memory_space<vmem>>, vector<1x1x2x128xf32>
    %233 = vector.shape_cast %232 : vector<1x1x2x128xf32> to vector<2x128xf32>
    %c0_120 = arith.constant 0 : index
    %c0_121 = arith.constant 0 : index
    %234 = memref.load %arg9[%c0_120, %c0_121] : memref<4x8xf32, #tpu.memory_space<smem>>
    %235 = vector.broadcast %234 : f32 to vector<2x128xf32>
    %236 = arith.mulf %227, %235 : vector<2x128xf32>
    %c1_122 = arith.constant 1 : index
    %c0_123 = arith.constant 0 : index
    %237 = memref.load %arg9[%c1_122, %c0_123] : memref<4x8xf32, #tpu.memory_space<smem>>
    %238 = vector.broadcast %237 : f32 to vector<2x128xf32>
    %239 = arith.mulf %229, %238 : vector<2x128xf32>
    %240 = arith.addf %236, %239 : vector<2x128xf32>
    %c2_124 = arith.constant 2 : index
    %c0_125 = arith.constant 0 : index
    %241 = memref.load %arg9[%c2_124, %c0_125] : memref<4x8xf32, #tpu.memory_space<smem>>
    %242 = vector.broadcast %241 : f32 to vector<2x128xf32>
    %243 = arith.mulf %231, %242 : vector<2x128xf32>
    %244 = arith.addf %240, %243 : vector<2x128xf32>
    %c3_126 = arith.constant 3 : index
    %c0_127 = arith.constant 0 : index
    %245 = memref.load %arg9[%c3_126, %c0_127] : memref<4x8xf32, #tpu.memory_space<smem>>
    %246 = vector.broadcast %245 : f32 to vector<2x128xf32>
    %247 = arith.mulf %233, %246 : vector<2x128xf32>
    %248 = arith.addf %244, %247 : vector<2x128xf32>
    %c0_128 = arith.constant 0 : index
    %249 = memref.load %arg10[%c0_128] : memref<8xf32, #tpu.memory_space<smem>>
    %250 = vector.broadcast %249 : f32 to vector<2x128xf32>
    %251 = arith.addf %248, %250 : vector<2x128xf32>
    %cst_129 = arith.constant 0.000000e+00 : f32
    %252 = vector.broadcast %cst_129 : f32 to vector<2x128xf32>
    %253 = arith.cmpf ogt, %251, %252 : vector<2x128xf32>
    %c0_130 = arith.constant 0 : index
    %254 = memref.load %arg11[%c0_130] : memref<8xf32, #tpu.memory_space<smem>>
    %c0_131 = arith.constant 0 : index
    %255 = memref.load %arg12[%c0_131] : memref<8xf32, #tpu.memory_space<smem>>
    %256 = vector.broadcast %254 : f32 to vector<2x128xf32>
    %257 = vector.broadcast %255 : f32 to vector<2x128xf32>
    %258 = arith.select %253, %256, %257 : vector<2x128xi1>, vector<2x128xf32>
    %259 = arith.mulf %251, %258 : vector<2x128xf32>
    %260 = arith.addf %225, %259 : vector<2x128xf32>
    %c0_132 = arith.constant 0 : index
    %c1_133 = arith.constant 1 : index
    %261 = memref.load %arg9[%c0_132, %c1_133] : memref<4x8xf32, #tpu.memory_space<smem>>
    %262 = vector.broadcast %261 : f32 to vector<2x128xf32>
    %263 = arith.mulf %227, %262 : vector<2x128xf32>
    %c1_134 = arith.constant 1 : index
    %c1_135 = arith.constant 1 : index
    %264 = memref.load %arg9[%c1_134, %c1_135] : memref<4x8xf32, #tpu.memory_space<smem>>
    %265 = vector.broadcast %264 : f32 to vector<2x128xf32>
    %266 = arith.mulf %229, %265 : vector<2x128xf32>
    %267 = arith.addf %263, %266 : vector<2x128xf32>
    %c2_136 = arith.constant 2 : index
    %c1_137 = arith.constant 1 : index
    %268 = memref.load %arg9[%c2_136, %c1_137] : memref<4x8xf32, #tpu.memory_space<smem>>
    %269 = vector.broadcast %268 : f32 to vector<2x128xf32>
    %270 = arith.mulf %231, %269 : vector<2x128xf32>
    %271 = arith.addf %267, %270 : vector<2x128xf32>
    %c3_138 = arith.constant 3 : index
    %c1_139 = arith.constant 1 : index
    %272 = memref.load %arg9[%c3_138, %c1_139] : memref<4x8xf32, #tpu.memory_space<smem>>
    %273 = vector.broadcast %272 : f32 to vector<2x128xf32>
    %274 = arith.mulf %233, %273 : vector<2x128xf32>
    %275 = arith.addf %271, %274 : vector<2x128xf32>
    %c1_140 = arith.constant 1 : index
    %276 = memref.load %arg10[%c1_140] : memref<8xf32, #tpu.memory_space<smem>>
    %277 = vector.broadcast %276 : f32 to vector<2x128xf32>
    %278 = arith.addf %275, %277 : vector<2x128xf32>
    %cst_141 = arith.constant 0.000000e+00 : f32
    %279 = vector.broadcast %cst_141 : f32 to vector<2x128xf32>
    %280 = arith.cmpf ogt, %278, %279 : vector<2x128xf32>
    %c1_142 = arith.constant 1 : index
    %281 = memref.load %arg11[%c1_142] : memref<8xf32, #tpu.memory_space<smem>>
    %c1_143 = arith.constant 1 : index
    %282 = memref.load %arg12[%c1_143] : memref<8xf32, #tpu.memory_space<smem>>
    %283 = vector.broadcast %281 : f32 to vector<2x128xf32>
    %284 = vector.broadcast %282 : f32 to vector<2x128xf32>
    %285 = arith.select %280, %283, %284 : vector<2x128xi1>, vector<2x128xf32>
    %286 = arith.mulf %278, %285 : vector<2x128xf32>
    %287 = arith.addf %260, %286 : vector<2x128xf32>
    %c0_144 = arith.constant 0 : index
    %c2_145 = arith.constant 2 : index
    %288 = memref.load %arg9[%c0_144, %c2_145] : memref<4x8xf32, #tpu.memory_space<smem>>
    %289 = vector.broadcast %288 : f32 to vector<2x128xf32>
    %290 = arith.mulf %227, %289 : vector<2x128xf32>
    %c1_146 = arith.constant 1 : index
    %c2_147 = arith.constant 2 : index
    %291 = memref.load %arg9[%c1_146, %c2_147] : memref<4x8xf32, #tpu.memory_space<smem>>
    %292 = vector.broadcast %291 : f32 to vector<2x128xf32>
    %293 = arith.mulf %229, %292 : vector<2x128xf32>
    %294 = arith.addf %290, %293 : vector<2x128xf32>
    %c2_148 = arith.constant 2 : index
    %c2_149 = arith.constant 2 : index
    %295 = memref.load %arg9[%c2_148, %c2_149] : memref<4x8xf32, #tpu.memory_space<smem>>
    %296 = vector.broadcast %295 : f32 to vector<2x128xf32>
    %297 = arith.mulf %231, %296 : vector<2x128xf32>
    %298 = arith.addf %294, %297 : vector<2x128xf32>
    %c3_150 = arith.constant 3 : index
    %c2_151 = arith.constant 2 : index
    %299 = memref.load %arg9[%c3_150, %c2_151] : memref<4x8xf32, #tpu.memory_space<smem>>
    %300 = vector.broadcast %299 : f32 to vector<2x128xf32>
    %301 = arith.mulf %233, %300 : vector<2x128xf32>
    %302 = arith.addf %298, %301 : vector<2x128xf32>
    %c2_152 = arith.constant 2 : index
    %303 = memref.load %arg10[%c2_152] : memref<8xf32, #tpu.memory_space<smem>>
    %304 = vector.broadcast %303 : f32 to vector<2x128xf32>
    %305 = arith.addf %302, %304 : vector<2x128xf32>
    %cst_153 = arith.constant 0.000000e+00 : f32
    %306 = vector.broadcast %cst_153 : f32 to vector<2x128xf32>
    %307 = arith.cmpf ogt, %305, %306 : vector<2x128xf32>
    %c2_154 = arith.constant 2 : index
    %308 = memref.load %arg11[%c2_154] : memref<8xf32, #tpu.memory_space<smem>>
    %c2_155 = arith.constant 2 : index
    %309 = memref.load %arg12[%c2_155] : memref<8xf32, #tpu.memory_space<smem>>
    %310 = vector.broadcast %308 : f32 to vector<2x128xf32>
    %311 = vector.broadcast %309 : f32 to vector<2x128xf32>
    %312 = arith.select %307, %310, %311 : vector<2x128xi1>, vector<2x128xf32>
    %313 = arith.mulf %305, %312 : vector<2x128xf32>
    %314 = arith.addf %287, %313 : vector<2x128xf32>
    %c0_156 = arith.constant 0 : index
    %c3_157 = arith.constant 3 : index
    %315 = memref.load %arg9[%c0_156, %c3_157] : memref<4x8xf32, #tpu.memory_space<smem>>
    %316 = vector.broadcast %315 : f32 to vector<2x128xf32>
    %317 = arith.mulf %227, %316 : vector<2x128xf32>
    %c1_158 = arith.constant 1 : index
    %c3_159 = arith.constant 3 : index
    %318 = memref.load %arg9[%c1_158, %c3_159] : memref<4x8xf32, #tpu.memory_space<smem>>
    %319 = vector.broadcast %318 : f32 to vector<2x128xf32>
    %320 = arith.mulf %229, %319 : vector<2x128xf32>
    %321 = arith.addf %317, %320 : vector<2x128xf32>
    %c2_160 = arith.constant 2 : index
    %c3_161 = arith.constant 3 : index
    %322 = memref.load %arg9[%c2_160, %c3_161] : memref<4x8xf32, #tpu.memory_space<smem>>
    %323 = vector.broadcast %322 : f32 to vector<2x128xf32>
    %324 = arith.mulf %231, %323 : vector<2x128xf32>
    %325 = arith.addf %321, %324 : vector<2x128xf32>
    %c3_162 = arith.constant 3 : index
    %c3_163 = arith.constant 3 : index
    %326 = memref.load %arg9[%c3_162, %c3_163] : memref<4x8xf32, #tpu.memory_space<smem>>
    %327 = vector.broadcast %326 : f32 to vector<2x128xf32>
    %328 = arith.mulf %233, %327 : vector<2x128xf32>
    %329 = arith.addf %325, %328 : vector<2x128xf32>
    %c3_164 = arith.constant 3 : index
    %330 = memref.load %arg10[%c3_164] : memref<8xf32, #tpu.memory_space<smem>>
    %331 = vector.broadcast %330 : f32 to vector<2x128xf32>
    %332 = arith.addf %329, %331 : vector<2x128xf32>
    %cst_165 = arith.constant 0.000000e+00 : f32
    %333 = vector.broadcast %cst_165 : f32 to vector<2x128xf32>
    %334 = arith.cmpf ogt, %332, %333 : vector<2x128xf32>
    %c3_166 = arith.constant 3 : index
    %335 = memref.load %arg11[%c3_166] : memref<8xf32, #tpu.memory_space<smem>>
    %c3_167 = arith.constant 3 : index
    %336 = memref.load %arg12[%c3_167] : memref<8xf32, #tpu.memory_space<smem>>
    %337 = vector.broadcast %335 : f32 to vector<2x128xf32>
    %338 = vector.broadcast %336 : f32 to vector<2x128xf32>
    %339 = arith.select %334, %337, %338 : vector<2x128xi1>, vector<2x128xf32>
    %340 = arith.mulf %332, %339 : vector<2x128xf32>
    %341 = arith.addf %314, %340 : vector<2x128xf32>
    %c0_168 = arith.constant 0 : index
    %c4_169 = arith.constant 4 : index
    %342 = memref.load %arg9[%c0_168, %c4_169] : memref<4x8xf32, #tpu.memory_space<smem>>
    %343 = vector.broadcast %342 : f32 to vector<2x128xf32>
    %344 = arith.mulf %227, %343 : vector<2x128xf32>
    %c1_170 = arith.constant 1 : index
    %c4_171 = arith.constant 4 : index
    %345 = memref.load %arg9[%c1_170, %c4_171] : memref<4x8xf32, #tpu.memory_space<smem>>
    %346 = vector.broadcast %345 : f32 to vector<2x128xf32>
    %347 = arith.mulf %229, %346 : vector<2x128xf32>
    %348 = arith.addf %344, %347 : vector<2x128xf32>
    %c2_172 = arith.constant 2 : index
    %c4_173 = arith.constant 4 : index
    %349 = memref.load %arg9[%c2_172, %c4_173] : memref<4x8xf32, #tpu.memory_space<smem>>
    %350 = vector.broadcast %349 : f32 to vector<2x128xf32>
    %351 = arith.mulf %231, %350 : vector<2x128xf32>
    %352 = arith.addf %348, %351 : vector<2x128xf32>
    %c3_174 = arith.constant 3 : index
    %c4_175 = arith.constant 4 : index
    %353 = memref.load %arg9[%c3_174, %c4_175] : memref<4x8xf32, #tpu.memory_space<smem>>
    %354 = vector.broadcast %353 : f32 to vector<2x128xf32>
    %355 = arith.mulf %233, %354 : vector<2x128xf32>
    %356 = arith.addf %352, %355 : vector<2x128xf32>
    %c4_176 = arith.constant 4 : index
    %357 = memref.load %arg10[%c4_176] : memref<8xf32, #tpu.memory_space<smem>>
    %358 = vector.broadcast %357 : f32 to vector<2x128xf32>
    %359 = arith.addf %356, %358 : vector<2x128xf32>
    %cst_177 = arith.constant 0.000000e+00 : f32
    %360 = vector.broadcast %cst_177 : f32 to vector<2x128xf32>
    %361 = arith.cmpf ogt, %359, %360 : vector<2x128xf32>
    %c4_178 = arith.constant 4 : index
    %362 = memref.load %arg11[%c4_178] : memref<8xf32, #tpu.memory_space<smem>>
    %c4_179 = arith.constant 4 : index
    %363 = memref.load %arg12[%c4_179] : memref<8xf32, #tpu.memory_space<smem>>
    %364 = vector.broadcast %362 : f32 to vector<2x128xf32>
    %365 = vector.broadcast %363 : f32 to vector<2x128xf32>
    %366 = arith.select %361, %364, %365 : vector<2x128xi1>, vector<2x128xf32>
    %367 = arith.mulf %359, %366 : vector<2x128xf32>
    %368 = arith.addf %341, %367 : vector<2x128xf32>
    %c0_180 = arith.constant 0 : index
    %c5_181 = arith.constant 5 : index
    %369 = memref.load %arg9[%c0_180, %c5_181] : memref<4x8xf32, #tpu.memory_space<smem>>
    %370 = vector.broadcast %369 : f32 to vector<2x128xf32>
    %371 = arith.mulf %227, %370 : vector<2x128xf32>
    %c1_182 = arith.constant 1 : index
    %c5_183 = arith.constant 5 : index
    %372 = memref.load %arg9[%c1_182, %c5_183] : memref<4x8xf32, #tpu.memory_space<smem>>
    %373 = vector.broadcast %372 : f32 to vector<2x128xf32>
    %374 = arith.mulf %229, %373 : vector<2x128xf32>
    %375 = arith.addf %371, %374 : vector<2x128xf32>
    %c2_184 = arith.constant 2 : index
    %c5_185 = arith.constant 5 : index
    %376 = memref.load %arg9[%c2_184, %c5_185] : memref<4x8xf32, #tpu.memory_space<smem>>
    %377 = vector.broadcast %376 : f32 to vector<2x128xf32>
    %378 = arith.mulf %231, %377 : vector<2x128xf32>
    %379 = arith.addf %375, %378 : vector<2x128xf32>
    %c3_186 = arith.constant 3 : index
    %c5_187 = arith.constant 5 : index
    %380 = memref.load %arg9[%c3_186, %c5_187] : memref<4x8xf32, #tpu.memory_space<smem>>
    %381 = vector.broadcast %380 : f32 to vector<2x128xf32>
    %382 = arith.mulf %233, %381 : vector<2x128xf32>
    %383 = arith.addf %379, %382 : vector<2x128xf32>
    %c5_188 = arith.constant 5 : index
    %384 = memref.load %arg10[%c5_188] : memref<8xf32, #tpu.memory_space<smem>>
    %385 = vector.broadcast %384 : f32 to vector<2x128xf32>
    %386 = arith.addf %383, %385 : vector<2x128xf32>
    %cst_189 = arith.constant 0.000000e+00 : f32
    %387 = vector.broadcast %cst_189 : f32 to vector<2x128xf32>
    %388 = arith.cmpf ogt, %386, %387 : vector<2x128xf32>
    %c5_190 = arith.constant 5 : index
    %389 = memref.load %arg11[%c5_190] : memref<8xf32, #tpu.memory_space<smem>>
    %c5_191 = arith.constant 5 : index
    %390 = memref.load %arg12[%c5_191] : memref<8xf32, #tpu.memory_space<smem>>
    %391 = vector.broadcast %389 : f32 to vector<2x128xf32>
    %392 = vector.broadcast %390 : f32 to vector<2x128xf32>
    %393 = arith.select %388, %391, %392 : vector<2x128xi1>, vector<2x128xf32>
    %394 = arith.mulf %386, %393 : vector<2x128xf32>
    %395 = arith.addf %368, %394 : vector<2x128xf32>
    %c0_192 = arith.constant 0 : index
    %c6_193 = arith.constant 6 : index
    %396 = memref.load %arg9[%c0_192, %c6_193] : memref<4x8xf32, #tpu.memory_space<smem>>
    %397 = vector.broadcast %396 : f32 to vector<2x128xf32>
    %398 = arith.mulf %227, %397 : vector<2x128xf32>
    %c1_194 = arith.constant 1 : index
    %c6_195 = arith.constant 6 : index
    %399 = memref.load %arg9[%c1_194, %c6_195] : memref<4x8xf32, #tpu.memory_space<smem>>
    %400 = vector.broadcast %399 : f32 to vector<2x128xf32>
    %401 = arith.mulf %229, %400 : vector<2x128xf32>
    %402 = arith.addf %398, %401 : vector<2x128xf32>
    %c2_196 = arith.constant 2 : index
    %c6_197 = arith.constant 6 : index
    %403 = memref.load %arg9[%c2_196, %c6_197] : memref<4x8xf32, #tpu.memory_space<smem>>
    %404 = vector.broadcast %403 : f32 to vector<2x128xf32>
    %405 = arith.mulf %231, %404 : vector<2x128xf32>
    %406 = arith.addf %402, %405 : vector<2x128xf32>
    %c3_198 = arith.constant 3 : index
    %c6_199 = arith.constant 6 : index
    %407 = memref.load %arg9[%c3_198, %c6_199] : memref<4x8xf32, #tpu.memory_space<smem>>
    %408 = vector.broadcast %407 : f32 to vector<2x128xf32>
    %409 = arith.mulf %233, %408 : vector<2x128xf32>
    %410 = arith.addf %406, %409 : vector<2x128xf32>
    %c6_200 = arith.constant 6 : index
    %411 = memref.load %arg10[%c6_200] : memref<8xf32, #tpu.memory_space<smem>>
    %412 = vector.broadcast %411 : f32 to vector<2x128xf32>
    %413 = arith.addf %410, %412 : vector<2x128xf32>
    %cst_201 = arith.constant 0.000000e+00 : f32
    %414 = vector.broadcast %cst_201 : f32 to vector<2x128xf32>
    %415 = arith.cmpf ogt, %413, %414 : vector<2x128xf32>
    %c6_202 = arith.constant 6 : index
    %416 = memref.load %arg11[%c6_202] : memref<8xf32, #tpu.memory_space<smem>>
    %c6_203 = arith.constant 6 : index
    %417 = memref.load %arg12[%c6_203] : memref<8xf32, #tpu.memory_space<smem>>
    %418 = vector.broadcast %416 : f32 to vector<2x128xf32>
    %419 = vector.broadcast %417 : f32 to vector<2x128xf32>
    %420 = arith.select %415, %418, %419 : vector<2x128xi1>, vector<2x128xf32>
    %421 = arith.mulf %413, %420 : vector<2x128xf32>
    %422 = arith.addf %395, %421 : vector<2x128xf32>
    %c0_204 = arith.constant 0 : index
    %c7_205 = arith.constant 7 : index
    %423 = memref.load %arg9[%c0_204, %c7_205] : memref<4x8xf32, #tpu.memory_space<smem>>
    %424 = vector.broadcast %423 : f32 to vector<2x128xf32>
    %425 = arith.mulf %227, %424 : vector<2x128xf32>
    %c1_206 = arith.constant 1 : index
    %c7_207 = arith.constant 7 : index
    %426 = memref.load %arg9[%c1_206, %c7_207] : memref<4x8xf32, #tpu.memory_space<smem>>
    %427 = vector.broadcast %426 : f32 to vector<2x128xf32>
    %428 = arith.mulf %229, %427 : vector<2x128xf32>
    %429 = arith.addf %425, %428 : vector<2x128xf32>
    %c2_208 = arith.constant 2 : index
    %c7_209 = arith.constant 7 : index
    %430 = memref.load %arg9[%c2_208, %c7_209] : memref<4x8xf32, #tpu.memory_space<smem>>
    %431 = vector.broadcast %430 : f32 to vector<2x128xf32>
    %432 = arith.mulf %231, %431 : vector<2x128xf32>
    %433 = arith.addf %429, %432 : vector<2x128xf32>
    %c3_210 = arith.constant 3 : index
    %c7_211 = arith.constant 7 : index
    %434 = memref.load %arg9[%c3_210, %c7_211] : memref<4x8xf32, #tpu.memory_space<smem>>
    %435 = vector.broadcast %434 : f32 to vector<2x128xf32>
    %436 = arith.mulf %233, %435 : vector<2x128xf32>
    %437 = arith.addf %433, %436 : vector<2x128xf32>
    %c7_212 = arith.constant 7 : index
    %438 = memref.load %arg10[%c7_212] : memref<8xf32, #tpu.memory_space<smem>>
    %439 = vector.broadcast %438 : f32 to vector<2x128xf32>
    %440 = arith.addf %437, %439 : vector<2x128xf32>
    %cst_213 = arith.constant 0.000000e+00 : f32
    %441 = vector.broadcast %cst_213 : f32 to vector<2x128xf32>
    %442 = arith.cmpf ogt, %440, %441 : vector<2x128xf32>
    %c7_214 = arith.constant 7 : index
    %443 = memref.load %arg11[%c7_214] : memref<8xf32, #tpu.memory_space<smem>>
    %c7_215 = arith.constant 7 : index
    %444 = memref.load %arg12[%c7_215] : memref<8xf32, #tpu.memory_space<smem>>
    %445 = vector.broadcast %443 : f32 to vector<2x128xf32>
    %446 = vector.broadcast %444 : f32 to vector<2x128xf32>
    %447 = arith.select %442, %445, %446 : vector<2x128xi1>, vector<2x128xf32>
    %448 = arith.mulf %440, %447 : vector<2x128xf32>
    %449 = arith.addf %422, %448 : vector<2x128xf32>
    %c0_216 = arith.constant 0 : index
    %c0_217 = arith.constant 0 : index
    %c0_218 = arith.constant 0 : index
    %c0_219 = arith.constant 0 : index
    %450 = vector.load %arg4[%c0_216, %c0_217, %c0_218, %c0_219] : memref<1x4x2x128xf32, #tpu.memory_space<vmem>>, vector<1x1x2x128xf32>
    %451 = vector.shape_cast %450 : vector<1x1x2x128xf32> to vector<2x128xf32>
    %c0_220 = arith.constant 0 : index
    %c1_221 = arith.constant 1 : index
    %c0_222 = arith.constant 0 : index
    %c0_223 = arith.constant 0 : index
    %452 = vector.load %arg4[%c0_220, %c1_221, %c0_222, %c0_223] : memref<1x4x2x128xf32, #tpu.memory_space<vmem>>, vector<1x1x2x128xf32>
    %453 = vector.shape_cast %452 : vector<1x1x2x128xf32> to vector<2x128xf32>
    %c0_224 = arith.constant 0 : index
    %c2_225 = arith.constant 2 : index
    %c0_226 = arith.constant 0 : index
    %c0_227 = arith.constant 0 : index
    %454 = vector.load %arg4[%c0_224, %c2_225, %c0_226, %c0_227] : memref<1x4x2x128xf32, #tpu.memory_space<vmem>>, vector<1x1x2x128xf32>
    %455 = vector.shape_cast %454 : vector<1x1x2x128xf32> to vector<2x128xf32>
    %c0_228 = arith.constant 0 : index
    %c3_229 = arith.constant 3 : index
    %c0_230 = arith.constant 0 : index
    %c0_231 = arith.constant 0 : index
    %456 = vector.load %arg4[%c0_228, %c3_229, %c0_230, %c0_231] : memref<1x4x2x128xf32, #tpu.memory_space<vmem>>, vector<1x1x2x128xf32>
    %457 = vector.shape_cast %456 : vector<1x1x2x128xf32> to vector<2x128xf32>
    %c0_232 = arith.constant 0 : index
    %c0_233 = arith.constant 0 : index
    %458 = memref.load %arg13[%c0_232, %c0_233] : memref<4x8xf32, #tpu.memory_space<smem>>
    %459 = vector.broadcast %458 : f32 to vector<2x128xf32>
    %460 = arith.mulf %451, %459 : vector<2x128xf32>
    %c1_234 = arith.constant 1 : index
    %c0_235 = arith.constant 0 : index
    %461 = memref.load %arg13[%c1_234, %c0_235] : memref<4x8xf32, #tpu.memory_space<smem>>
    %462 = vector.broadcast %461 : f32 to vector<2x128xf32>
    %463 = arith.mulf %453, %462 : vector<2x128xf32>
    %464 = arith.addf %460, %463 : vector<2x128xf32>
    %c2_236 = arith.constant 2 : index
    %c0_237 = arith.constant 0 : index
    %465 = memref.load %arg13[%c2_236, %c0_237] : memref<4x8xf32, #tpu.memory_space<smem>>
    %466 = vector.broadcast %465 : f32 to vector<2x128xf32>
    %467 = arith.mulf %455, %466 : vector<2x128xf32>
    %468 = arith.addf %464, %467 : vector<2x128xf32>
    %c3_238 = arith.constant 3 : index
    %c0_239 = arith.constant 0 : index
    %469 = memref.load %arg13[%c3_238, %c0_239] : memref<4x8xf32, #tpu.memory_space<smem>>
    %470 = vector.broadcast %469 : f32 to vector<2x128xf32>
    %471 = arith.mulf %457, %470 : vector<2x128xf32>
    %472 = arith.addf %468, %471 : vector<2x128xf32>
    %c0_240 = arith.constant 0 : index
    %473 = memref.load %arg14[%c0_240] : memref<8xf32, #tpu.memory_space<smem>>
    %474 = vector.broadcast %473 : f32 to vector<2x128xf32>
    %475 = arith.addf %472, %474 : vector<2x128xf32>
    %cst_241 = arith.constant 0.000000e+00 : f32
    %476 = vector.broadcast %cst_241 : f32 to vector<2x128xf32>
    %477 = arith.cmpf ogt, %475, %476 : vector<2x128xf32>
    %c0_242 = arith.constant 0 : index
    %478 = memref.load %arg15[%c0_242] : memref<8xf32, #tpu.memory_space<smem>>
    %c0_243 = arith.constant 0 : index
    %479 = memref.load %arg16[%c0_243] : memref<8xf32, #tpu.memory_space<smem>>
    %480 = vector.broadcast %478 : f32 to vector<2x128xf32>
    %481 = vector.broadcast %479 : f32 to vector<2x128xf32>
    %482 = arith.select %477, %480, %481 : vector<2x128xi1>, vector<2x128xf32>
    %483 = arith.mulf %475, %482 : vector<2x128xf32>
    %484 = arith.addf %449, %483 : vector<2x128xf32>
    %c0_244 = arith.constant 0 : index
    %c1_245 = arith.constant 1 : index
    %485 = memref.load %arg13[%c0_244, %c1_245] : memref<4x8xf32, #tpu.memory_space<smem>>
    %486 = vector.broadcast %485 : f32 to vector<2x128xf32>
    %487 = arith.mulf %451, %486 : vector<2x128xf32>
    %c1_246 = arith.constant 1 : index
    %c1_247 = arith.constant 1 : index
    %488 = memref.load %arg13[%c1_246, %c1_247] : memref<4x8xf32, #tpu.memory_space<smem>>
    %489 = vector.broadcast %488 : f32 to vector<2x128xf32>
    %490 = arith.mulf %453, %489 : vector<2x128xf32>
    %491 = arith.addf %487, %490 : vector<2x128xf32>
    %c2_248 = arith.constant 2 : index
    %c1_249 = arith.constant 1 : index
    %492 = memref.load %arg13[%c2_248, %c1_249] : memref<4x8xf32, #tpu.memory_space<smem>>
    %493 = vector.broadcast %492 : f32 to vector<2x128xf32>
    %494 = arith.mulf %455, %493 : vector<2x128xf32>
    %495 = arith.addf %491, %494 : vector<2x128xf32>
    %c3_250 = arith.constant 3 : index
    %c1_251 = arith.constant 1 : index
    %496 = memref.load %arg13[%c3_250, %c1_251] : memref<4x8xf32, #tpu.memory_space<smem>>
    %497 = vector.broadcast %496 : f32 to vector<2x128xf32>
    %498 = arith.mulf %457, %497 : vector<2x128xf32>
    %499 = arith.addf %495, %498 : vector<2x128xf32>
    %c1_252 = arith.constant 1 : index
    %500 = memref.load %arg14[%c1_252] : memref<8xf32, #tpu.memory_space<smem>>
    %501 = vector.broadcast %500 : f32 to vector<2x128xf32>
    %502 = arith.addf %499, %501 : vector<2x128xf32>
    %cst_253 = arith.constant 0.000000e+00 : f32
    %503 = vector.broadcast %cst_253 : f32 to vector<2x128xf32>
    %504 = arith.cmpf ogt, %502, %503 : vector<2x128xf32>
    %c1_254 = arith.constant 1 : index
    %505 = memref.load %arg15[%c1_254] : memref<8xf32, #tpu.memory_space<smem>>
    %c1_255 = arith.constant 1 : index
    %506 = memref.load %arg16[%c1_255] : memref<8xf32, #tpu.memory_space<smem>>
    %507 = vector.broadcast %505 : f32 to vector<2x128xf32>
    %508 = vector.broadcast %506 : f32 to vector<2x128xf32>
    %509 = arith.select %504, %507, %508 : vector<2x128xi1>, vector<2x128xf32>
    %510 = arith.mulf %502, %509 : vector<2x128xf32>
    %511 = arith.addf %484, %510 : vector<2x128xf32>
    %c0_256 = arith.constant 0 : index
    %c2_257 = arith.constant 2 : index
    %512 = memref.load %arg13[%c0_256, %c2_257] : memref<4x8xf32, #tpu.memory_space<smem>>
    %513 = vector.broadcast %512 : f32 to vector<2x128xf32>
    %514 = arith.mulf %451, %513 : vector<2x128xf32>
    %c1_258 = arith.constant 1 : index
    %c2_259 = arith.constant 2 : index
    %515 = memref.load %arg13[%c1_258, %c2_259] : memref<4x8xf32, #tpu.memory_space<smem>>
    %516 = vector.broadcast %515 : f32 to vector<2x128xf32>
    %517 = arith.mulf %453, %516 : vector<2x128xf32>
    %518 = arith.addf %514, %517 : vector<2x128xf32>
    %c2_260 = arith.constant 2 : index
    %c2_261 = arith.constant 2 : index
    %519 = memref.load %arg13[%c2_260, %c2_261] : memref<4x8xf32, #tpu.memory_space<smem>>
    %520 = vector.broadcast %519 : f32 to vector<2x128xf32>
    %521 = arith.mulf %455, %520 : vector<2x128xf32>
    %522 = arith.addf %518, %521 : vector<2x128xf32>
    %c3_262 = arith.constant 3 : index
    %c2_263 = arith.constant 2 : index
    %523 = memref.load %arg13[%c3_262, %c2_263] : memref<4x8xf32, #tpu.memory_space<smem>>
    %524 = vector.broadcast %523 : f32 to vector<2x128xf32>
    %525 = arith.mulf %457, %524 : vector<2x128xf32>
    %526 = arith.addf %522, %525 : vector<2x128xf32>
    %c2_264 = arith.constant 2 : index
    %527 = memref.load %arg14[%c2_264] : memref<8xf32, #tpu.memory_space<smem>>
    %528 = vector.broadcast %527 : f32 to vector<2x128xf32>
    %529 = arith.addf %526, %528 : vector<2x128xf32>
    %cst_265 = arith.constant 0.000000e+00 : f32
    %530 = vector.broadcast %cst_265 : f32 to vector<2x128xf32>
    %531 = arith.cmpf ogt, %529, %530 : vector<2x128xf32>
    %c2_266 = arith.constant 2 : index
    %532 = memref.load %arg15[%c2_266] : memref<8xf32, #tpu.memory_space<smem>>
    %c2_267 = arith.constant 2 : index
    %533 = memref.load %arg16[%c2_267] : memref<8xf32, #tpu.memory_space<smem>>
    %534 = vector.broadcast %532 : f32 to vector<2x128xf32>
    %535 = vector.broadcast %533 : f32 to vector<2x128xf32>
    %536 = arith.select %531, %534, %535 : vector<2x128xi1>, vector<2x128xf32>
    %537 = arith.mulf %529, %536 : vector<2x128xf32>
    %538 = arith.addf %511, %537 : vector<2x128xf32>
    %c0_268 = arith.constant 0 : index
    %c3_269 = arith.constant 3 : index
    %539 = memref.load %arg13[%c0_268, %c3_269] : memref<4x8xf32, #tpu.memory_space<smem>>
    %540 = vector.broadcast %539 : f32 to vector<2x128xf32>
    %541 = arith.mulf %451, %540 : vector<2x128xf32>
    %c1_270 = arith.constant 1 : index
    %c3_271 = arith.constant 3 : index
    %542 = memref.load %arg13[%c1_270, %c3_271] : memref<4x8xf32, #tpu.memory_space<smem>>
    %543 = vector.broadcast %542 : f32 to vector<2x128xf32>
    %544 = arith.mulf %453, %543 : vector<2x128xf32>
    %545 = arith.addf %541, %544 : vector<2x128xf32>
    %c2_272 = arith.constant 2 : index
    %c3_273 = arith.constant 3 : index
    %546 = memref.load %arg13[%c2_272, %c3_273] : memref<4x8xf32, #tpu.memory_space<smem>>
    %547 = vector.broadcast %546 : f32 to vector<2x128xf32>
    %548 = arith.mulf %455, %547 : vector<2x128xf32>
    %549 = arith.addf %545, %548 : vector<2x128xf32>
    %c3_274 = arith.constant 3 : index
    %c3_275 = arith.constant 3 : index
    %550 = memref.load %arg13[%c3_274, %c3_275] : memref<4x8xf32, #tpu.memory_space<smem>>
    %551 = vector.broadcast %550 : f32 to vector<2x128xf32>
    %552 = arith.mulf %457, %551 : vector<2x128xf32>
    %553 = arith.addf %549, %552 : vector<2x128xf32>
    %c3_276 = arith.constant 3 : index
    %554 = memref.load %arg14[%c3_276] : memref<8xf32, #tpu.memory_space<smem>>
    %555 = vector.broadcast %554 : f32 to vector<2x128xf32>
    %556 = arith.addf %553, %555 : vector<2x128xf32>
    %cst_277 = arith.constant 0.000000e+00 : f32
    %557 = vector.broadcast %cst_277 : f32 to vector<2x128xf32>
    %558 = arith.cmpf ogt, %556, %557 : vector<2x128xf32>
    %c3_278 = arith.constant 3 : index
    %559 = memref.load %arg15[%c3_278] : memref<8xf32, #tpu.memory_space<smem>>
    %c3_279 = arith.constant 3 : index
    %560 = memref.load %arg16[%c3_279] : memref<8xf32, #tpu.memory_space<smem>>
    %561 = vector.broadcast %559 : f32 to vector<2x128xf32>
    %562 = vector.broadcast %560 : f32 to vector<2x128xf32>
    %563 = arith.select %558, %561, %562 : vector<2x128xi1>, vector<2x128xf32>
    %564 = arith.mulf %556, %563 : vector<2x128xf32>
    %565 = arith.addf %538, %564 : vector<2x128xf32>
    %c0_280 = arith.constant 0 : index
    %c4_281 = arith.constant 4 : index
    %566 = memref.load %arg13[%c0_280, %c4_281] : memref<4x8xf32, #tpu.memory_space<smem>>
    %567 = vector.broadcast %566 : f32 to vector<2x128xf32>
    %568 = arith.mulf %451, %567 : vector<2x128xf32>
    %c1_282 = arith.constant 1 : index
    %c4_283 = arith.constant 4 : index
    %569 = memref.load %arg13[%c1_282, %c4_283] : memref<4x8xf32, #tpu.memory_space<smem>>
    %570 = vector.broadcast %569 : f32 to vector<2x128xf32>
    %571 = arith.mulf %453, %570 : vector<2x128xf32>
    %572 = arith.addf %568, %571 : vector<2x128xf32>
    %c2_284 = arith.constant 2 : index
    %c4_285 = arith.constant 4 : index
    %573 = memref.load %arg13[%c2_284, %c4_285] : memref<4x8xf32, #tpu.memory_space<smem>>
    %574 = vector.broadcast %573 : f32 to vector<2x128xf32>
    %575 = arith.mulf %455, %574 : vector<2x128xf32>
    %576 = arith.addf %572, %575 : vector<2x128xf32>
    %c3_286 = arith.constant 3 : index
    %c4_287 = arith.constant 4 : index
    %577 = memref.load %arg13[%c3_286, %c4_287] : memref<4x8xf32, #tpu.memory_space<smem>>
    %578 = vector.broadcast %577 : f32 to vector<2x128xf32>
    %579 = arith.mulf %457, %578 : vector<2x128xf32>
    %580 = arith.addf %576, %579 : vector<2x128xf32>
    %c4_288 = arith.constant 4 : index
    %581 = memref.load %arg14[%c4_288] : memref<8xf32, #tpu.memory_space<smem>>
    %582 = vector.broadcast %581 : f32 to vector<2x128xf32>
    %583 = arith.addf %580, %582 : vector<2x128xf32>
    %cst_289 = arith.constant 0.000000e+00 : f32
    %584 = vector.broadcast %cst_289 : f32 to vector<2x128xf32>
    %585 = arith.cmpf ogt, %583, %584 : vector<2x128xf32>
    %c4_290 = arith.constant 4 : index
    %586 = memref.load %arg15[%c4_290] : memref<8xf32, #tpu.memory_space<smem>>
    %c4_291 = arith.constant 4 : index
    %587 = memref.load %arg16[%c4_291] : memref<8xf32, #tpu.memory_space<smem>>
    %588 = vector.broadcast %586 : f32 to vector<2x128xf32>
    %589 = vector.broadcast %587 : f32 to vector<2x128xf32>
    %590 = arith.select %585, %588, %589 : vector<2x128xi1>, vector<2x128xf32>
    %591 = arith.mulf %583, %590 : vector<2x128xf32>
    %592 = arith.addf %565, %591 : vector<2x128xf32>
    %c0_292 = arith.constant 0 : index
    %c5_293 = arith.constant 5 : index
    %593 = memref.load %arg13[%c0_292, %c5_293] : memref<4x8xf32, #tpu.memory_space<smem>>
    %594 = vector.broadcast %593 : f32 to vector<2x128xf32>
    %595 = arith.mulf %451, %594 : vector<2x128xf32>
    %c1_294 = arith.constant 1 : index
    %c5_295 = arith.constant 5 : index
    %596 = memref.load %arg13[%c1_294, %c5_295] : memref<4x8xf32, #tpu.memory_space<smem>>
    %597 = vector.broadcast %596 : f32 to vector<2x128xf32>
    %598 = arith.mulf %453, %597 : vector<2x128xf32>
    %599 = arith.addf %595, %598 : vector<2x128xf32>
    %c2_296 = arith.constant 2 : index
    %c5_297 = arith.constant 5 : index
    %600 = memref.load %arg13[%c2_296, %c5_297] : memref<4x8xf32, #tpu.memory_space<smem>>
    %601 = vector.broadcast %600 : f32 to vector<2x128xf32>
    %602 = arith.mulf %455, %601 : vector<2x128xf32>
    %603 = arith.addf %599, %602 : vector<2x128xf32>
    %c3_298 = arith.constant 3 : index
    %c5_299 = arith.constant 5 : index
    %604 = memref.load %arg13[%c3_298, %c5_299] : memref<4x8xf32, #tpu.memory_space<smem>>
    %605 = vector.broadcast %604 : f32 to vector<2x128xf32>
    %606 = arith.mulf %457, %605 : vector<2x128xf32>
    %607 = arith.addf %603, %606 : vector<2x128xf32>
    %c5_300 = arith.constant 5 : index
    %608 = memref.load %arg14[%c5_300] : memref<8xf32, #tpu.memory_space<smem>>
    %609 = vector.broadcast %608 : f32 to vector<2x128xf32>
    %610 = arith.addf %607, %609 : vector<2x128xf32>
    %cst_301 = arith.constant 0.000000e+00 : f32
    %611 = vector.broadcast %cst_301 : f32 to vector<2x128xf32>
    %612 = arith.cmpf ogt, %610, %611 : vector<2x128xf32>
    %c5_302 = arith.constant 5 : index
    %613 = memref.load %arg15[%c5_302] : memref<8xf32, #tpu.memory_space<smem>>
    %c5_303 = arith.constant 5 : index
    %614 = memref.load %arg16[%c5_303] : memref<8xf32, #tpu.memory_space<smem>>
    %615 = vector.broadcast %613 : f32 to vector<2x128xf32>
    %616 = vector.broadcast %614 : f32 to vector<2x128xf32>
    %617 = arith.select %612, %615, %616 : vector<2x128xi1>, vector<2x128xf32>
    %618 = arith.mulf %610, %617 : vector<2x128xf32>
    %619 = arith.addf %592, %618 : vector<2x128xf32>
    %c0_304 = arith.constant 0 : index
    %c6_305 = arith.constant 6 : index
    %620 = memref.load %arg13[%c0_304, %c6_305] : memref<4x8xf32, #tpu.memory_space<smem>>
    %621 = vector.broadcast %620 : f32 to vector<2x128xf32>
    %622 = arith.mulf %451, %621 : vector<2x128xf32>
    %c1_306 = arith.constant 1 : index
    %c6_307 = arith.constant 6 : index
    %623 = memref.load %arg13[%c1_306, %c6_307] : memref<4x8xf32, #tpu.memory_space<smem>>
    %624 = vector.broadcast %623 : f32 to vector<2x128xf32>
    %625 = arith.mulf %453, %624 : vector<2x128xf32>
    %626 = arith.addf %622, %625 : vector<2x128xf32>
    %c2_308 = arith.constant 2 : index
    %c6_309 = arith.constant 6 : index
    %627 = memref.load %arg13[%c2_308, %c6_309] : memref<4x8xf32, #tpu.memory_space<smem>>
    %628 = vector.broadcast %627 : f32 to vector<2x128xf32>
    %629 = arith.mulf %455, %628 : vector<2x128xf32>
    %630 = arith.addf %626, %629 : vector<2x128xf32>
    %c3_310 = arith.constant 3 : index
    %c6_311 = arith.constant 6 : index
    %631 = memref.load %arg13[%c3_310, %c6_311] : memref<4x8xf32, #tpu.memory_space<smem>>
    %632 = vector.broadcast %631 : f32 to vector<2x128xf32>
    %633 = arith.mulf %457, %632 : vector<2x128xf32>
    %634 = arith.addf %630, %633 : vector<2x128xf32>
    %c6_312 = arith.constant 6 : index
    %635 = memref.load %arg14[%c6_312] : memref<8xf32, #tpu.memory_space<smem>>
    %636 = vector.broadcast %635 : f32 to vector<2x128xf32>
    %637 = arith.addf %634, %636 : vector<2x128xf32>
    %cst_313 = arith.constant 0.000000e+00 : f32
    %638 = vector.broadcast %cst_313 : f32 to vector<2x128xf32>
    %639 = arith.cmpf ogt, %637, %638 : vector<2x128xf32>
    %c6_314 = arith.constant 6 : index
    %640 = memref.load %arg15[%c6_314] : memref<8xf32, #tpu.memory_space<smem>>
    %c6_315 = arith.constant 6 : index
    %641 = memref.load %arg16[%c6_315] : memref<8xf32, #tpu.memory_space<smem>>
    %642 = vector.broadcast %640 : f32 to vector<2x128xf32>
    %643 = vector.broadcast %641 : f32 to vector<2x128xf32>
    %644 = arith.select %639, %642, %643 : vector<2x128xi1>, vector<2x128xf32>
    %645 = arith.mulf %637, %644 : vector<2x128xf32>
    %646 = arith.addf %619, %645 : vector<2x128xf32>
    %c0_316 = arith.constant 0 : index
    %c7_317 = arith.constant 7 : index
    %647 = memref.load %arg13[%c0_316, %c7_317] : memref<4x8xf32, #tpu.memory_space<smem>>
    %648 = vector.broadcast %647 : f32 to vector<2x128xf32>
    %649 = arith.mulf %451, %648 : vector<2x128xf32>
    %c1_318 = arith.constant 1 : index
    %c7_319 = arith.constant 7 : index
    %650 = memref.load %arg13[%c1_318, %c7_319] : memref<4x8xf32, #tpu.memory_space<smem>>
    %651 = vector.broadcast %650 : f32 to vector<2x128xf32>
    %652 = arith.mulf %453, %651 : vector<2x128xf32>
    %653 = arith.addf %649, %652 : vector<2x128xf32>
    %c2_320 = arith.constant 2 : index
    %c7_321 = arith.constant 7 : index
    %654 = memref.load %arg13[%c2_320, %c7_321] : memref<4x8xf32, #tpu.memory_space<smem>>
    %655 = vector.broadcast %654 : f32 to vector<2x128xf32>
    %656 = arith.mulf %455, %655 : vector<2x128xf32>
    %657 = arith.addf %653, %656 : vector<2x128xf32>
    %c3_322 = arith.constant 3 : index
    %c7_323 = arith.constant 7 : index
    %658 = memref.load %arg13[%c3_322, %c7_323] : memref<4x8xf32, #tpu.memory_space<smem>>
    %659 = vector.broadcast %658 : f32 to vector<2x128xf32>
    %660 = arith.mulf %457, %659 : vector<2x128xf32>
    %661 = arith.addf %657, %660 : vector<2x128xf32>
    %c7_324 = arith.constant 7 : index
    %662 = memref.load %arg14[%c7_324] : memref<8xf32, #tpu.memory_space<smem>>
    %663 = vector.broadcast %662 : f32 to vector<2x128xf32>
    %664 = arith.addf %661, %663 : vector<2x128xf32>
    %cst_325 = arith.constant 0.000000e+00 : f32
    %665 = vector.broadcast %cst_325 : f32 to vector<2x128xf32>
    %666 = arith.cmpf ogt, %664, %665 : vector<2x128xf32>
    %c7_326 = arith.constant 7 : index
    %667 = memref.load %arg15[%c7_326] : memref<8xf32, #tpu.memory_space<smem>>
    %c7_327 = arith.constant 7 : index
    %668 = memref.load %arg16[%c7_327] : memref<8xf32, #tpu.memory_space<smem>>
    %669 = vector.broadcast %667 : f32 to vector<2x128xf32>
    %670 = vector.broadcast %668 : f32 to vector<2x128xf32>
    %671 = arith.select %666, %669, %670 : vector<2x128xi1>, vector<2x128xf32>
    %672 = arith.mulf %664, %671 : vector<2x128xf32>
    %673 = arith.addf %646, %672 : vector<2x128xf32>
    %c0_328 = arith.constant 0 : index
    %c0_329 = arith.constant 0 : index
    %c0_330 = arith.constant 0 : index
    %c0_331 = arith.constant 0 : index
    %674 = vector.load %arg18[%c0_328, %c0_329, %c0_330, %c0_331] : memref<1x1x2x128xf32, #tpu.memory_space<vmem>>, vector<1x1x2x128xf32>
    %675 = vector.shape_cast %674 : vector<1x1x2x128xf32> to vector<2x128xf32>
    %676 = vector.shape_cast %673 : vector<2x128xf32> to vector<1x1x2x128xf32>
    tpu.vector_store %arg18[%c0_328, %c0_329, %c0_330, %c0_331], %676 {strides = array<i32>} : memref<1x1x2x128xf32, #tpu.memory_space<vmem>>, vector<1x1x2x128xf32>,
    return
  }
  func.func @transform_0(%arg0: i32, %arg1: i32) -> (i32, i32, i32, i32) {
    %c0_i32 = arith.constant 0 : i32
    %c0_i32_0 = arith.constant 0 : i32
    %c0_i32_1 = arith.constant 0 : i32
    return %arg0, %c0_i32, %arg1, %c0_i32_0 : i32, i32, i32, i32
  }
  func.func @transform_1(%arg0: i32, %arg1: i32) -> (i32, i32, i32, i32) {
    %c0_i32 = arith.constant 0 : i32
    %c0_i32_0 = arith.constant 0 : i32
    %c0_i32_1 = arith.constant 0 : i32
    return %arg0, %c0_i32, %arg1, %c0_i32_0 : i32, i32, i32, i32
  }
  func.func @transform_2(%arg0: i32, %arg1: i32) -> (i32, i32, i32, i32) {
    %c0_i32 = arith.constant 0 : i32
    %c0_i32_0 = arith.constant 0 : i32
    %c0_i32_1 = arith.constant 0 : i32
    return %arg0, %c0_i32, %arg1, %c0_i32_0 : i32, i32, i32, i32
  }
  func.func @transform_3(%arg0: i32, %arg1: i32) -> (i32, i32) {
    %c0_i32 = arith.constant 0 : i32
    %c0_i32_0 = arith.constant 0 : i32
    %c0_i32_1 = arith.constant 0 : i32
    return %c0_i32, %c0_i32_0 : i32, i32
  }
  func.func @transform_4(%arg0: i32, %arg1: i32) -> i32 {
    %c0_i32 = arith.constant 0 : i32
    %c0_i32_0 = arith.constant 0 : i32
    return %c0_i32 : i32
  }
  func.func @transform_5(%arg0: i32, %arg1: i32) -> i32 {
    %c0_i32 = arith.constant 0 : i32
    %c0_i32_0 = arith.constant 0 : i32
    return %c0_i32 : i32
  }
  func.func @transform_6(%arg0: i32, %arg1: i32) -> i32 {
    %c0_i32 = arith.constant 0 : i32
    %c0_i32_0 = arith.constant 0 : i32
    return %c0_i32 : i32
  }
  func.func @transform_7(%arg0: i32, %arg1: i32) -> (i32, i32) {
    %c0_i32 = arith.constant 0 : i32
    %c0_i32_0 = arith.constant 0 : i32
    %c0_i32_1 = arith.constant 0 : i32
    return %c0_i32, %c0_i32_0 : i32, i32
  }
  func.func @transform_8(%arg0: i32, %arg1: i32) -> i32 {
    %c0_i32 = arith.constant 0 : i32
    %c0_i32_0 = arith.constant 0 : i32
    return %c0_i32 : i32
  }
  func.func @transform_9(%arg0: i32, %arg1: i32) -> i32 {
    %c0_i32 = arith.constant 0 : i32
    %c0_i32_0 = arith.constant 0 : i32
    return %c0_i32 : i32
  }
  func.func @transform_10(%arg0: i32, %arg1: i32) -> i32 {
    %c0_i32 = arith.constant 0 : i32
    %c0_i32_0 = arith.constant 0 : i32
    return %c0_i32 : i32
  }
  func.func @transform_11(%arg0: i32, %arg1: i32) -> (i32, i32) {
    %c0_i32 = arith.constant 0 : i32
    %c0_i32_0 = arith.constant 0 : i32
    %c0_i32_1 = arith.constant 0 : i32
    return %c0_i32, %c0_i32_0 : i32, i32
  }
  func.func @transform_12(%arg0: i32, %arg1: i32) -> i32 {
    %c0_i32 = arith.constant 0 : i32
    %c0_i32_0 = arith.constant 0 : i32
    return %c0_i32 : i32
  }
  func.func @transform_13(%arg0: i32, %arg1: i32) -> i32 {
    %c0_i32 = arith.constant 0 : i32
    %c0_i32_0 = arith.constant 0 : i32
    return %c0_i32 : i32
  }
  func.func @transform_14(%arg0: i32, %arg1: i32) -> i32 {
    %c0_i32 = arith.constant 0 : i32
    %c0_i32_0 = arith.constant 0 : i32
    return %c0_i32 : i32
  }
  func.func @transform_15(%arg0: i32, %arg1: i32) -> i32 {
    %c0_i32 = arith.constant 0 : i32
    %c0_i32_0 = arith.constant 0 : i32
    return %c0_i32 : i32
  }
  func.func @transform_16(%arg0: i32, %arg1: i32) -> (i32, i32, i32, i32) {
    %c0_i32 = arith.constant 0 : i32
    %c0_i32_0 = arith.constant 0 : i32
    %c0_i32_1 = arith.constant 0 : i32
    return %arg0, %c0_i32, %arg1, %c0_i32_0 : i32, i32, i32, i32
  }
}

</mosaic_0001>

<llo_original>
// kernel: edge_featlayer_3.1
$region0: #{edge_featlayer_3.1}
  #allocation0 [shape = 'u32[]', space=smem, size = 0x4, offset = 0x4, fixed_abs, tag = 'smem constant byte address 0x4 - core index']
  #allocation1 [shape = 'u32[144,128]{1,0:T(1,128)}', space=vmem, size = 0x12000, scoped, tag = 'internal scratch']
  #allocation2 [shape = 'f32[1]{0:T(128)S(6)}', space=smem, size = 0x200, scoped, tag = 'scoped memory for edge_featlayer_3.1']
  %s0 = inlined_call_operand.vmem [shape: f32[2,4,2,128], index: 0, kind: input, shape index: {}]
  %s1 = inlined_call_operand.vmem [shape: f32[2,4,2,128], index: 1, kind: input, shape index: {}]
  %s2 = inlined_call_operand.vmem [shape: f32[2,4,2,128], index: 2, kind: input, shape index: {}]
  %s3 = inlined_call_operand.vmem [shape: f32[4,8], index: 3, kind: input, shape index: {}]
  %s4 = inlined_call_operand.vmem [shape: f32[8], index: 4, kind: input, shape index: {}]
  %s5 = inlined_call_operand.vmem [shape: f32[8], index: 5, kind: input, shape index: {}]
  %s6 = inlined_call_operand.vmem [shape: f32[8], index: 6, kind: input, shape index: {}]
  %s7 = inlined_call_operand.vmem [shape: f32[4,8], index: 7, kind: input, shape index: {}]
  %s8 = inlined_call_operand.vmem [shape: f32[8], index: 8, kind: input, shape index: {}]
  %s9 = inlined_call_operand.vmem [shape: f32[8], index: 9, kind: input, shape index: {}]
  %s10 = inlined_call_operand.vmem [shape: f32[8], index: 10, kind: input, shape index: {}]
  %s11 = inlined_call_operand.vmem [shape: f32[4,8], index: 11, kind: input, shape index: {}]
  %s12 = inlined_call_operand.vmem [shape: f32[8], index: 12, kind: input, shape index: {}]
  %s13 = inlined_call_operand.vmem [shape: f32[8], index: 13, kind: input, shape index: {}]
  %s14 = inlined_call_operand.vmem [shape: f32[8], index: 14, kind: input, shape index: {}]
  %s15 = inlined_call_operand.<no memory space> [shape: f32[1], index: 15, kind: input, shape index: {}]
  %s16 = inlined_call_operand.vmem [shape: f32[2,1,2,128], index: 16, kind: output, shape index: {}]
  %s17 = sld [smem:[#allocation0]]
  $region145: #{edge_featlayer_3.1} parent=0
    _
  %s19 = ssub.s32 1, %s17
  %s20 = scalar_select 0, %s19, %s17
  %21 = sst [smem:[#allocation2]] %s15
  $region1: #{edge_featlayer_3.1} parent=0
    #allocation3 [shape = 'u8[2048]{0}', space=smem, size = 0x800, scoped, tag = 'input window, operand 3, single buffered']
    #allocation4 [shape = 's32[2]{0}', space=sflag, size = 0x8, scoped, tag = 'scoped memory for edge_featlayer_3.1']
    #allocation5 [shape = 'u8[512]{0}', space=smem, size = 0x200, scoped, tag = 'input window, operand 4, single buffered']
    #allocation6 [shape = 's32[1]{0}', space=sflag, size = 0x4, scoped, tag = 'scoped memory for edge_featlayer_3.1']
    #allocation7 [shape = 'u8[512]{0}', space=smem, size = 0x200, scoped, tag = 'input window, operand 5, single buffered']
    #allocation8 [shape = 'u8[512]{0}', space=smem, size = 0x200, scoped, tag = 'input window, operand 6, single buffered']
    #allocation9 [shape = 's32[1]{0}', space=sflag, size = 0x4, scoped, tag = 'scoped memory for edge_featlayer_3.1']
    #allocation10 [shape = 'u8[2048]{0}', space=smem, size = 0x800, scoped, tag = 'input window, operand 7, single buffered']
    #allocation11 [shape = 'u8[512]{0}', space=smem, size = 0x200, scoped, tag = 'input window, operand 8, single buffered']
    #allocation12 [shape = 's32[1]{0}', space=sflag, size = 0x4, scoped, tag = 'scoped memory for edge_featlayer_3.1']
    #allocation13 [shape = 'u8[512]{0}', space=smem, size = 0x200, scoped, tag = 'input window, operand 9, single buffered']
    #allocation14 [shape = 'u8[512]{0}', space=smem, size = 0x200, scoped, tag = 'input window, operand 10, single buffered']
    #allocation15 [shape = 's32[1]{0}', space=sflag, size = 0x4, scoped, tag = 'scoped memory for edge_featlayer_3.1']
    #allocation16 [shape = 'u8[2048]{0}', space=smem, size = 0x800, scoped, tag = 'input window, operand 11, single buffered']
    #allocation17 [shape = 'u8[512]{0}', space=smem, size = 0x200, scoped, tag = 'input window, operand 12, single buffered']
    #allocation18 [shape = 's32[1]{0}', space=sflag, size = 0x4, scoped, tag = 'scoped memory for edge_featlayer_3.1']
    #allocation19 [shape = 'u8[512]{0}', space=smem, size = 0x200, scoped, tag = 'input window, operand 13, single buffered']
    #allocation20 [shape = 'u8[512]{0}', space=smem, size = 0x200, scoped, tag = 'input window, operand 14, single buffered']
    #allocation21 [shape = 's32[1]{0}', space=sflag, size = 0x4, scoped, tag = 'scoped memory for edge_featlayer_3.1']
    %22 = vsyncpa [#allocation4], 0
    %23 = vsyncpa [#allocation6], 0
    %24 = vsyncpa [#allocation9], 0
    %25 = vsyncpa [#allocation12], 0
    %26 = vsyncpa [#allocation15], 0
    %27 = vsyncpa [#allocation18], 0
    %28 = vsyncpa [#allocation21], 0
    loop: start=0, step=1, limit=4
    $region2: #{edge_featlayer_3.1} parent=1 // loop_pre_header
      _
    $region3: #{edge_featlayer_3.1} parent=1 // loop_header
      %s30 = sphi 0, %s34
      %p31 = scmp.ge.s32.totalorder %s30, 4
      %s37 = sphi 0, %s49
      %s38 = sphi 0, %s45
      %s39 = sphi 0, %s37
      %s40 = sphi 0, %s38
      %s41 = sphi 0, %s39
      %s42 = sphi 0, %s40
      %s54 = sphi 0, %s56
      %s57 = sphi 0, %s54
      %s58 = sphi 0, %s57
      %s74 = sphi 0, %s58
      %s82 = sphi 0, %s84
      %s85 = sphi 0, %s82
      %s86 = sphi 0, %s85
      %s102 = sphi 0, %s86
      %s110 = sphi 0, %s112
      %s113 = sphi 0, %s110
      %s114 = sphi 0, %s113
      %s130 = sphi 0, %s114
      %s134 = sphi 0, %s134
      %s136 = sphi 0, %s134
      %s137 = sphi 0, %s136
      %s151 = sphi 0, %s137
      %s155 = sphi 0, %s155
      %s157 = sphi 0, %s155
      %s158 = sphi 0, %s157
      %s172 = sphi 0, %s158
      %s176 = sphi 0, %s176
      %s178 = sphi 0, %s176
      %s179 = sphi 0, %s178
      %s193 = sphi 0, %s179
      %s197 = sphi 0, %s197
      %s199 = sphi 0, %s197
      %s200 = sphi 0, %s199
      %s214 = sphi 0, %s200
      %s218 = sphi 0, %s218
      %s220 = sphi 0, %s218
      %s221 = sphi 0, %s220
      %s235 = sphi 0, %s221
      %s239 = sphi 0, %s239
      %s241 = sphi 0, %s239
      %s242 = sphi 0, %s241
      %s256 = sphi 0, %s242
      %s260 = sphi 0, %s260
      %s262 = sphi 0, %s260
      %s263 = sphi 0, %s262
      %s277 = sphi 0, %s263
      %s281 = sphi 0, %s281
      %s283 = sphi 0, %s281
      %s284 = sphi 0, %s283
      %s298 = sphi 0, %s284
      %s302 = sphi 0, %s302
      %s304 = sphi 0, %s302
      %s305 = sphi 0, %s304
      %s319 = sphi 0, %s305
      %s323 = sphi 0, %s323
      %s325 = sphi 0, %s323
      %s326 = sphi 0, %s325
      %s340 = sphi 0, %s326
      %s344 = sphi 0, %s344
      %s346 = sphi 0, %s344
      %s347 = sphi 0, %s346
      %s361 = sphi 0, %s347
      %s365 = sphi 0, %s365
      %s367 = sphi 0, %s365
      %s368 = sphi 0, %s367
      %s382 = sphi 0, %s368
      %s386 = sphi 0, %s386
      %s388 = sphi 0, %s386
      %s389 = sphi 0, %s388
      %s403 = sphi 0, %s389
      %s411 = sphi 0, %s413
      %s414 = sphi 0, %s411
      %s415 = sphi 0, %s414
      %s431 = sphi 0, %s415
    $region4: #{edge_featlayer_3.1} parent=1 // loop_header_branch
      %33 = sbr.rel (%p31) target = $region8
    $region5: #{edge_featlayer_3.1} parent=1 // loop_body
      %s35 = ssub.s32 %s30, 1
      %s36 = ssub.s32 %s30, 2
      %s43 = sadd.s32 1, %s38
      %p44 = scmp.ge.s32.totalorder %s43, 1
      %s45 = scalar_select %p44, 0, %s43
      %s46 = sadd.s32 1, %s37
      %s47 = scalar_select %p44, %s46, %s37
      %p48 = scmp.ge.s32.totalorder %s47, 2
      %s49 = scalar_select %p48, 0, %s47
      %s50 = ssub.s32 %s37, %s49
      %s51 = ssub.s32 %s38, %s45
      %s52 = sor.u32 %s50, %s51
      %p53 = scmp.eq.s32.totalorder %s52, 0
      %s55 = sadd.s32 %s54, 1
      %s56 = scalar_select %p53, %s54, %s55
      %p59 = pneg %p53
      %p60 = scmp.eq.s32.totalorder %s30, 1
      %p61 = por %p59, %p60
      %p62 = scmp.ne.s32.totalorder %s54, %s57
      %p63 = scmp.eq.s32.totalorder %s30, 0
      %p64 = por %p62, %p63
      %p65 = scmp.ne.s32.totalorder %s54, %s57
      %p66 = scmp.eq.s32.totalorder %s35, 1
      %p67 = por %p65, %p66
      %p68 = scmp.ne.s32.totalorder %s57, %s58
      %p69 = scmp.eq.s32.totalorder %s35, 0
      %p70 = por %p68, %p69
      %p71 = scmp.ne.s32.totalorder %s57, %s58
      %p72 = scmp.eq.s32.totalorder %s36, 1
      %p73 = por %p71, %p72
      %p75 = scmp.ne.s32.totalorder %s58, %s74
      %p76 = scmp.eq.s32.totalorder %s36, 0
      %p77 = por %p75, %p76
      %s78 = ssub.s32 %s37, %s49
      %s79 = ssub.s32 %s38, %s45
      %s80 = sor.u32 %s78, %s79
      %p81 = scmp.eq.s32.totalorder %s80, 0
      %s83 = sadd.s32 %s82, 1
      %s84 = scalar_select %p81, %s82, %s83
      %p87 = pneg %p81
      %p88 = scmp.eq.s32.totalorder %s30, 1
      %p89 = por %p87, %p88
      %p90 = scmp.ne.s32.totalorder %s82, %s85
      %p91 = scmp.eq.s32.totalorder %s30, 0
      %p92 = por %p90, %p91
      %p93 = scmp.ne.s32.totalorder %s82, %s85
      %p94 = scmp.eq.s32.totalorder %s35, 1
      %p95 = por %p93, %p94
      %p96 = scmp.ne.s32.totalorder %s85, %s86
      %p97 = scmp.eq.s32.totalorder %s35, 0
      %p98 = por %p96, %p97
      %p99 = scmp.ne.s32.totalorder %s85, %s86
      %p100 = scmp.eq.s32.totalorder %s36, 1
      %p101 = por %p99, %p100
      %p103 = scmp.ne.s32.totalorder %s86, %s102
      %p104 = scmp.eq.s32.totalorder %s36, 0
      %p105 = por %p103, %p104
      %s106 = ssub.s32 %s37, %s49
      %s107 = ssub.s32 %s38, %s45
      %s108 = sor.u32 %s106, %s107
      %p109 = scmp.eq.s32.totalorder %s108, 0
      %s111 = sadd.s32 %s110, 1
      %s112 = scalar_select %p109, %s110, %s111
      %p115 = pneg %p109
      %p116 = scmp.eq.s32.totalorder %s30, 1
      %p117 = por %p115, %p116
      %p118 = scmp.ne.s32.totalorder %s110, %s113
      %p119 = scmp.eq.s32.totalorder %s30, 0
      %p120 = por %p118, %p119
      %p121 = scmp.ne.s32.totalorder %s110, %s113
      %p122 = scmp.eq.s32.totalorder %s35, 1
      %p123 = por %p121, %p122
      %p124 = scmp.ne.s32.totalorder %s113, %s114
      %p125 = scmp.eq.s32.totalorder %s35, 0
      %p126 = por %p124, %p125
      %p127 = scmp.ne.s32.totalorder %s113, %s114
      %p128 = scmp.eq.s32.totalorder %s36, 1
      %p129 = por %p127, %p128
      %p131 = scmp.ne.s32.totalorder %s114, %s130
      %p132 = scmp.eq.s32.totalorder %s36, 0
      %p133 = por %p131, %p132
      %s135 = sadd.s32 %s134, 1
      %p138 = scmp.eq.s32.totalorder %s30, 1
      %p139 = scmp.ne.s32.totalorder %s134, %s136
      %p140 = scmp.eq.s32.totalorder %s30, 0
      %p141 = por %p139, %p140
      %p142 = scmp.ne.s32.totalorder %s134, %s136
      %p143 = scmp.eq.s32.totalorder %s35, 1
      %p144 = por %p142, %p143
      %p145 = scmp.ne.s32.totalorder %s136, %s137
      %p146 = scmp.eq.s32.totalorder %s35, 0
      %p147 = por %p145, %p146
      %p148 = scmp.ne.s32.totalorder %s136, %s137
      %p149 = scmp.eq.s32.totalorder %s36, 1
      %p150 = por %p148, %p149
      %p152 = scmp.ne.s32.totalorder %s137, %s151
      %p153 = scmp.eq.s32.totalorder %s36, 0
      %p154 = por %p152, %p153
      %s156 = sadd.s32 %s155, 1
      %p159 = scmp.eq.s32.totalorder %s30, 1
      %p160 = scmp.ne.s32.totalorder %s155, %s157
      %p161 = scmp.eq.s32.totalorder %s30, 0
      %p162 = por %p160, %p161
      %p163 = scmp.ne.s32.totalorder %s155, %s157
      %p164 = scmp.eq.s32.totalorder %s35, 1
      %p165 = por %p163, %p164
      %p166 = scmp.ne.s32.totalorder %s157, %s158
      %p167 = scmp.eq.s32.totalorder %s35, 0
      %p168 = por %p166, %p167
      %p169 = scmp.ne.s32.totalorder %s157, %s158
      %p170 = scmp.eq.s32.totalorder %s36, 1
      %p171 = por %p169, %p170
      %p173 = scmp.ne.s32.totalorder %s158, %s172
      %p174 = scmp.eq.s32.totalorder %s36, 0
      %p175 = por %p173, %p174
      %s177 = sadd.s32 %s176, 1
      %p180 = scmp.eq.s32.totalorder %s30, 1
      %p181 = scmp.ne.s32.totalorder %s176, %s178
      %p182 = scmp.eq.s32.totalorder %s30, 0
      %p183 = por %p181, %p182
      %p184 = scmp.ne.s32.totalorder %s176, %s178
      %p185 = scmp.eq.s32.totalorder %s35, 1
      %p186 = por %p184, %p185
      %p187 = scmp.ne.s32.totalorder %s178, %s179
      %p188 = scmp.eq.s32.totalorder %s35, 0
      %p189 = por %p187, %p188
      %p190 = scmp.ne.s32.totalorder %s178, %s179
      %p191 = scmp.eq.s32.totalorder %s36, 1
      %p192 = por %p190, %p191
      %p194 = scmp.ne.s32.totalorder %s179, %s193
      %p195 = scmp.eq.s32.totalorder %s36, 0
      %p196 = por %p194, %p195
      %s198 = sadd.s32 %s197, 1
      %p201 = scmp.eq.s32.totalorder %s30, 1
      %p202 = scmp.ne.s32.totalorder %s197, %s199
      %p203 = scmp.eq.s32.totalorder %s30, 0
      %p204 = por %p202, %p203
      %p205 = scmp.ne.s32.totalorder %s197, %s199
      %p206 = scmp.eq.s32.totalorder %s35, 1
      %p207 = por %p205, %p206
      %p208 = scmp.ne.s32.totalorder %s199, %s200
      %p209 = scmp.eq.s32.totalorder %s35, 0
      %p210 = por %p208, %p209
      %p211 = scmp.ne.s32.totalorder %s199, %s200
      %p212 = scmp.eq.s32.totalorder %s36, 1
      %p213 = por %p211, %p212
      %p215 = scmp.ne.s32.totalorder %s200, %s214
      %p216 = scmp.eq.s32.totalorder %s36, 0
      %p217 = por %p215, %p216
      %s219 = sadd.s32 %s218, 1
      %p222 = scmp.eq.s32.totalorder %s30, 1
      %p223 = scmp.ne.s32.totalorder %s218, %s220
      %p224 = scmp.eq.s32.totalorder %s30, 0
      %p225 = por %p223, %p224
      %p226 = scmp.ne.s32.totalorder %s218, %s220
      %p227 = scmp.eq.s32.totalorder %s35, 1
      %p228 = por %p226, %p227
      %p229 = scmp.ne.s32.totalorder %s220, %s221
      %p230 = scmp.eq.s32.totalorder %s35, 0
      %p231 = por %p229, %p230
      %p232 = scmp.ne.s32.totalorder %s220, %s221
      %p233 = scmp.eq.s32.totalorder %s36, 1
      %p234 = por %p232, %p233
      %p236 = scmp.ne.s32.totalorder %s221, %s235
      %p237 = scmp.eq.s32.totalorder %s36, 0
      %p238 = por %p236, %p237
      %s240 = sadd.s32 %s239, 1
      %p243 = scmp.eq.s32.totalorder %s30, 1
      %p244 = scmp.ne.s32.totalorder %s239, %s241
      %p245 = scmp.eq.s32.totalorder %s30, 0
      %p246 = por %p244, %p245
      %p247 = scmp.ne.s32.totalorder %s239, %s241
      %p248 = scmp.eq.s32.totalorder %s35, 1
      %p249 = por %p247, %p248
      %p250 = scmp.ne.s32.totalorder %s241, %s242
      %p251 = scmp.eq.s32.totalorder %s35, 0
      %p252 = por %p250, %p251
      %p253 = scmp.ne.s32.totalorder %s241, %s242
      %p254 = scmp.eq.s32.totalorder %s36, 1
      %p255 = por %p253, %p254
      %p257 = scmp.ne.s32.totalorder %s242, %s256
      %p258 = scmp.eq.s32.totalorder %s36, 0
      %p259 = por %p257, %p258
      %s261 = sadd.s32 %s260, 1
      %p264 = scmp.eq.s32.totalorder %s30, 1
      %p265 = scmp.ne.s32.totalorder %s260, %s262
      %p266 = scmp.eq.s32.totalorder %s30, 0
      %p267 = por %p265, %p266
      %p268 = scmp.ne.s32.totalorder %s260, %s262
      %p269 = scmp.eq.s32.totalorder %s35, 1
      %p270 = por %p268, %p269
      %p271 = scmp.ne.s32.totalorder %s262, %s263
      %p272 = scmp.eq.s32.totalorder %s35, 0
      %p273 = por %p271, %p272
      %p274 = scmp.ne.s32.totalorder %s262, %s263
      %p275 = scmp.eq.s32.totalorder %s36, 1
      %p276 = por %p274, %p275
      %p278 = scmp.ne.s32.totalorder %s263, %s277
      %p279 = scmp.eq.s32.totalorder %s36, 0
      %p280 = por %p278, %p279
      %s282 = sadd.s32 %s281, 1
      %p285 = scmp.eq.s32.totalorder %s30, 1
      %p286 = scmp.ne.s32.totalorder %s281, %s283
      %p287 = scmp.eq.s32.totalorder %s30, 0
      %p288 = por %p286, %p287
      %p289 = scmp.ne.s32.totalorder %s281, %s283
      %p290 = scmp.eq.s32.totalorder %s35, 1
      %p291 = por %p289, %p290
      %p292 = scmp.ne.s32.totalorder %s283, %s284
      %p293 = scmp.eq.s32.totalorder %s35, 0
      %p294 = por %p292, %p293
      %p295 = scmp.ne.s32.totalorder %s283, %s284
      %p296 = scmp.eq.s32.totalorder %s36, 1
      %p297 = por %p295, %p296
      %p299 = scmp.ne.s32.totalorder %s284, %s298
      %p300 = scmp.eq.s32.totalorder %s36, 0
      %p301 = por %p299, %p300
      %s303 = sadd.s32 %s302, 1
      %p306 = scmp.eq.s32.totalorder %s30, 1
      %p307 = scmp.ne.s32.totalorder %s302, %s304
      %p308 = scmp.eq.s32.totalorder %s30, 0
      %p309 = por %p307, %p308
      %p310 = scmp.ne.s32.totalorder %s302, %s304
      %p311 = scmp.eq.s32.totalorder %s35, 1
      %p312 = por %p310, %p311
      %p313 = scmp.ne.s32.totalorder %s304, %s305
      %p314 = scmp.eq.s32.totalorder %s35, 0
      %p315 = por %p313, %p314
      %p316 = scmp.ne.s32.totalorder %s304, %s305
      %p317 = scmp.eq.s32.totalorder %s36, 1
      %p318 = por %p316, %p317
      %p320 = scmp.ne.s32.totalorder %s305, %s319
      %p321 = scmp.eq.s32.totalorder %s36, 0
      %p322 = por %p320, %p321
      %s324 = sadd.s32 %s323, 1
      %p327 = scmp.eq.s32.totalorder %s30, 1
      %p328 = scmp.ne.s32.totalorder %s323, %s325
      %p329 = scmp.eq.s32.totalorder %s30, 0
      %p330 = por %p328, %p329
      %p331 = scmp.ne.s32.totalorder %s323, %s325
      %p332 = scmp.eq.s32.totalorder %s35, 1
      %p333 = por %p331, %p332
      %p334 = scmp.ne.s32.totalorder %s325, %s326
      %p335 = scmp.eq.s32.totalorder %s35, 0
      %p336 = por %p334, %p335
      %p337 = scmp.ne.s32.totalorder %s325, %s326
      %p338 = scmp.eq.s32.totalorder %s36, 1
      %p339 = por %p337, %p338
      %p341 = scmp.ne.s32.totalorder %s326, %s340
      %p342 = scmp.eq.s32.totalorder %s36, 0
      %p343 = por %p341, %p342
      %s345 = sadd.s32 %s344, 1
      %p348 = scmp.eq.s32.totalorder %s30, 1
      %p349 = scmp.ne.s32.totalorder %s344, %s346
      %p350 = scmp.eq.s32.totalorder %s30, 0
      %p351 = por %p349, %p350
      %p352 = scmp.ne.s32.totalorder %s344, %s346
      %p353 = scmp.eq.s32.totalorder %s35, 1
      %p354 = por %p352, %p353
      %p355 = scmp.ne.s32.totalorder %s346, %s347
      %p356 = scmp.eq.s32.totalorder %s35, 0
      %p357 = por %p355, %p356
      %p358 = scmp.ne.s32.totalorder %s346, %s347
      %p359 = scmp.eq.s32.totalorder %s36, 1
      %p360 = por %p358, %p359
      %p362 = scmp.ne.s32.totalorder %s347, %s361
      %p363 = scmp.eq.s32.totalorder %s36, 0
      %p364 = por %p362, %p363
      %s366 = sadd.s32 %s365, 1
      %p369 = scmp.eq.s32.totalorder %s30, 1
      %p370 = scmp.ne.s32.totalorder %s365, %s367
      %p371 = scmp.eq.s32.totalorder %s30, 0
      %p372 = por %p370, %p371
      %p373 = scmp.ne.s32.totalorder %s365, %s367
      %p374 = scmp.eq.s32.totalorder %s35, 1
      %p375 = por %p373, %p374
      %p376 = scmp.ne.s32.totalorder %s367, %s368
      %p377 = scmp.eq.s32.totalorder %s35, 0
      %p378 = por %p376, %p377
      %p379 = scmp.ne.s32.totalorder %s367, %s368
      %p380 = scmp.eq.s32.totalorder %s36, 1
      %p381 = por %p379, %p380
      %p383 = scmp.ne.s32.totalorder %s368, %s382
      %p384 = scmp.eq.s32.totalorder %s36, 0
      %p385 = por %p383, %p384
      %s387 = sadd.s32 %s386, 1
      %p390 = scmp.eq.s32.totalorder %s30, 1
      %p391 = scmp.ne.s32.totalorder %s386, %s388
      %p392 = scmp.eq.s32.totalorder %s30, 0
      %p393 = por %p391, %p392
      %p394 = scmp.ne.s32.totalorder %s386, %s388
      %p395 = scmp.eq.s32.totalorder %s35, 1
      %p396 = por %p394, %p395
      %p397 = scmp.ne.s32.totalorder %s388, %s389
      %p398 = scmp.eq.s32.totalorder %s35, 0
      %p399 = por %p397, %p398
      %p400 = scmp.ne.s32.totalorder %s388, %s389
      %p401 = scmp.eq.s32.totalorder %s36, 1
      %p402 = por %p400, %p401
      %p404 = scmp.ne.s32.totalorder %s389, %s403
      %p405 = scmp.eq.s32.totalorder %s36, 0
      %p406 = por %p404, %p405
      %s407 = ssub.s32 %s37, %s49
      %s408 = ssub.s32 %s38, %s45
      %s409 = sor.u32 %s407, %s408
      %p410 = scmp.eq.s32.totalorder %s409, 0
      %s412 = sadd.s32 %s411, 1
      %s413 = scalar_select %p410, %s411, %s412
      %p416 = pneg %p410
      %p417 = scmp.eq.s32.totalorder %s30, 1
      %p418 = por %p416, %p417
      %p419 = scmp.ne.s32.totalorder %s411, %s414
      %p420 = scmp.eq.s32.totalorder %s30, 0
      %p421 = por %p419, %p420
      %p422 = scmp.ne.s32.totalorder %s411, %s414
      %p423 = scmp.eq.s32.totalorder %s35, 1
      %p424 = por %p422, %p423
      %p425 = scmp.ne.s32.totalorder %s414, %s415
      %p426 = scmp.eq.s32.totalorder %s35, 0
      %p427 = por %p425, %p426
      %p428 = scmp.ne.s32.totalorder %s414, %s415
      %p429 = scmp.eq.s32.totalorder %s36, 1
      %p430 = por %p428, %p429
      %p432 = scmp.ne.s32.totalorder %s415, %s431
      %p433 = scmp.eq.s32.totalorder %s36, 0
      %p434 = por %p432, %p433
      %p435 = scmp.le.s32.totalorder 1, %s30
      %p436 = scmp.lt.s32.totalorder %s30, 3
      %p437 = pnand %p435, %p436
      %p438 = pneg %p437
      // Predicated region
      $region9: #{edge_featlayer_3.1} parent=5 // pred_check
        _
      $region10: #{edge_featlayer_3.1} parent=5 // pred_check_branch
        %440 = sbr.rel (%p437) target = $region12
      $region11: #{edge_featlayer_3.1} parent=5 // pred_region
        %s441 = ssub.s32 %s30, 1
        // Predicated region
        $region13: #{edge_featlayer_3.1} parent=11 // pred_check
          %p442 = pneg %p147
        $region14: #{edge_featlayer_3.1} parent=11 // pred_check_branch
          %444 = sbr.rel (%p442) target = $region16
        $region15: #{edge_featlayer_3.1} parent=11 // pred_region
          %s446 = ssub.s32 64, 64
          %447 = vsyncadd [#allocation4], %s446
          %s449 = sshll.u32 %s3, 4
          %s450 = int_to_ptr.vmem [resolvable:$true] %s449
          %452 = dma.vmem_to_smem %s450, 64, [#allocation3], [#allocation4]
        $region16: #{edge_featlayer_3.1} parent=11 // pred_fallthru
          _
        // Predicated region
        $region17: #{edge_featlayer_3.1} parent=11 // pred_check
          %p453 = pneg %p168
        $region18: #{edge_featlayer_3.1} parent=11 // pred_check_branch
          %455 = sbr.rel (%p453) target = $region20
        $region19: #{edge_featlayer_3.1} parent=11 // pred_region
          %s457 = ssub.s32 16, 16
          %458 = vsyncadd [#allocation6], %s457
          %s460 = sshll.u32 %s4, 4
          %s461 = int_to_ptr.vmem [resolvable:$true] %s460
          %463 = dma.vmem_to_smem %s461, 16, [#allocation5], [#allocation6]
        $region20: #{edge_featlayer_3.1} parent=11 // pred_fallthru
          _
        // Predicated region
        $region21: #{edge_featlayer_3.1} parent=11 // pred_check
          %p464 = pneg %p189
        $region22: #{edge_featlayer_3.1} parent=11 // pred_check_branch
          %466 = sbr.rel (%p464) target = $region24
        $region23: #{edge_featlayer_3.1} parent=11 // pred_region
          %s468 = ssub.s32 16, 16
          %469 = vsyncadd [#allocation6], %s468
          %s471 = sshll.u32 %s5, 4
          %s472 = int_to_ptr.vmem [resolvable:$true] %s471
          %474 = dma.vmem_to_smem %s472, 16, [#allocation7], [#allocation6]
        $region24: #{edge_featlayer_3.1} parent=11 // pred_fallthru
          _
        // Predicated region
        $region25: #{edge_featlayer_3.1} parent=11 // pred_check
          %p475 = pneg %p210
        $region26: #{edge_featlayer_3.1} parent=11 // pred_check_branch
          %477 = sbr.rel (%p475) target = $region28
        $region27: #{edge_featlayer_3.1} parent=11 // pred_region
          %s479 = ssub.s32 16, 16
          %480 = vsyncadd [#allocation9], %s479
          %s482 = sshll.u32 %s6, 4
          %s483 = int_to_ptr.vmem [resolvable:$true] %s482
          %485 = dma.vmem_to_smem %s483, 16, [#allocation8], [#allocation9]
        $region28: #{edge_featlayer_3.1} parent=11 // pred_fallthru
          _
        // Predicated region
        $region29: #{edge_featlayer_3.1} parent=11 // pred_check
          %p486 = pneg %p231
        $region30: #{edge_featlayer_3.1} parent=11 // pred_check_branch
          %488 = sbr.rel (%p486) target = $region32
        $region31: #{edge_featlayer_3.1} parent=11 // pred_region
          %s490 = ssub.s32 64, 64
          %491 = vsyncadd [#allocation9], %s490
          %s493 = sshll.u32 %s7, 4
          %s494 = int_to_ptr.vmem [resolvable:$true] %s493
          %496 = dma.vmem_to_smem %s494, 64, [#allocation10], [#allocation9]
        $region32: #{edge_featlayer_3.1} parent=11 // pred_fallthru
          _
        // Predicated region
        $region33: #{edge_featlayer_3.1} parent=11 // pred_check
          %p497 = pneg %p252
        $region34: #{edge_featlayer_3.1} parent=11 // pred_check_branch
          %499 = sbr.rel (%p497) target = $region36
        $region35: #{edge_featlayer_3.1} parent=11 // pred_region
          %s501 = ssub.s32 16, 16
          %502 = vsyncadd [#allocation12], %s501
          %s504 = sshll.u32 %s8, 4
          %s505 = int_to_ptr.vmem [resolvable:$true] %s504
          %507 = dma.vmem_to_smem %s505, 16, [#allocation11], [#allocation12]
        $region36: #{edge_featlayer_3.1} parent=11 // pred_fallthru
          _
        // Predicated region
        $region37: #{edge_featlayer_3.1} parent=11 // pred_check
          %p508 = pneg %p273
        $region38: #{edge_featlayer_3.1} parent=11 // pred_check_branch
          %510 = sbr.rel (%p508) target = $region40
        $region39: #{edge_featlayer_3.1} parent=11 // pred_region
          %s512 = ssub.s32 16, 16
          %513 = vsyncadd [#allocation12], %s512
          %s515 = sshll.u32 %s9, 4
          %s516 = int_to_ptr.vmem [resolvable:$true] %s515
          %518 = dma.vmem_to_smem %s516, 16, [#allocation13], [#allocation12]
        $region40: #{edge_featlayer_3.1} parent=11 // pred_fallthru
          _
        // Predicated region
        $region41: #{edge_featlayer_3.1} parent=11 // pred_check
          %p519 = pneg %p294
        $region42: #{edge_featlayer_3.1} parent=11 // pred_check_branch
          %521 = sbr.rel (%p519) target = $region44
        $region43: #{edge_featlayer_3.1} parent=11 // pred_region
          %s523 = ssub.s32 16, 16
          %524 = vsyncadd [#allocation15], %s523
          %s526 = sshll.u32 %s10, 4
          %s527 = int_to_ptr.vmem [resolvable:$true] %s526
          %529 = dma.vmem_to_smem %s527, 16, [#allocation14], [#allocation15]
        $region44: #{edge_featlayer_3.1} parent=11 // pred_fallthru
          _
        // Predicated region
        $region45: #{edge_featlayer_3.1} parent=11 // pred_check
          %p530 = pneg %p315
        $region46: #{edge_featlayer_3.1} parent=11 // pred_check_branch
          %532 = sbr.rel (%p530) target = $region48
        $region47: #{edge_featlayer_3.1} parent=11 // pred_region
          %s534 = ssub.s32 64, 64
          %535 = vsyncadd [#allocation15], %s534
          %s537 = sshll.u32 %s11, 4
          %s538 = int_to_ptr.vmem [resolvable:$true] %s537
          %540 = dma.vmem_to_smem %s538, 64, [#allocation16], [#allocation15]
        $region48: #{edge_featlayer_3.1} parent=11 // pred_fallthru
          _
        // Predicated region
        $region49: #{edge_featlayer_3.1} parent=11 // pred_check
          %p541 = pneg %p336
        $region50: #{edge_featlayer_3.1} parent=11 // pred_check_branch
          %543 = sbr.rel (%p541) target = $region52
        $region51: #{edge_featlayer_3.1} parent=11 // pred_region
          %s545 = ssub.s32 16, 16
          %546 = vsyncadd [#allocation18], %s545
          %s548 = sshll.u32 %s12, 4
          %s549 = int_to_ptr.vmem [resolvable:$true] %s548
          %551 = dma.vmem_to_smem %s549, 16, [#allocation17], [#allocation18]
        $region52: #{edge_featlayer_3.1} parent=11 // pred_fallthru
          _
        // Predicated region
        $region53: #{edge_featlayer_3.1} parent=11 // pred_check
          %p552 = pneg %p357
        $region54: #{edge_featlayer_3.1} parent=11 // pred_check_branch
          %554 = sbr.rel (%p552) target = $region56
        $region55: #{edge_featlayer_3.1} parent=11 // pred_region
          %s556 = ssub.s32 16, 16
          %557 = vsyncadd [#allocation18], %s556
          %s559 = sshll.u32 %s13, 4
          %s560 = int_to_ptr.vmem [resolvable:$true] %s559
          %562 = dma.vmem_to_smem %s560, 16, [#allocation19], [#allocation18]
        $region56: #{edge_featlayer_3.1} parent=11 // pred_fallthru
          _
        // Predicated region
        $region57: #{edge_featlayer_3.1} parent=11 // pred_check
          %p563 = pneg %p378
        $region58: #{edge_featlayer_3.1} parent=11 // pred_check_branch
          %565 = sbr.rel (%p563) target = $region60
        $region59: #{edge_featlayer_3.1} parent=11 // pred_region
          %s567 = ssub.s32 16, 16
          %568 = vsyncadd [#allocation21], %s567
          %s570 = sshll.u32 %s14, 4
          %s571 = int_to_ptr.vmem [resolvable:$true] %s570
          %573 = dma.vmem_to_smem %s571, 16, [#allocation20], [#allocation21]
        $region60: #{edge_featlayer_3.1} parent=11 // pred_fallthru
          _
        // Predicated region
        $region61: #{edge_featlayer_3.1} parent=11 // pred_check
          %p574 = pneg %p399
        $region62: #{edge_featlayer_3.1} parent=11 // pred_check_branch
          %576 = sbr.rel (%p574) target = $region64
        $region63: #{edge_featlayer_3.1} parent=11 // pred_region
          _
        $region64: #{edge_featlayer_3.1} parent=11 // pred_fallthru
          _
      $region12: #{edge_featlayer_3.1} parent=5 // pred_fallthru
        _
      %p577 = scmp.lt.s32.totalorder %s30, 2
      // Predicated region
      $region65: #{edge_featlayer_3.1} parent=5 // pred_check
        %p578 = pneg %p577
      $region66: #{edge_featlayer_3.1} parent=5 // pred_check_branch
        %580 = sbr.rel (%p578) target = $region68
      $region67: #{edge_featlayer_3.1} parent=5 // pred_region
        // Predicated region
        $region69: #{edge_featlayer_3.1} parent=67 // pred_check
          %p581 = pneg %p64
        $region70: #{edge_featlayer_3.1} parent=67 // pred_check_branch
          %583 = sbr.rel (%p581) target = $region72
        $region71: #{edge_featlayer_3.1} parent=67 // pred_region
          %p584 = scmp.lt.s32.totalorder %s37, 1
          %s585 = scalar_select %p584, %s37, 1
          %p586 = scmp.lt.s32.totalorder %s38, 0
          %s587 = scalar_select %p586, %s38, 0
          %s588 = smul.addr %s585, 4
          %s589 = sadd.s32 %s587, %s588
          %s590 = smul.addr %s589, 2
          %s591 = scalar_lea.vmem %s0, %s590
        $region72: #{edge_featlayer_3.1} parent=67 // pred_fallthru
          _
        // Predicated region
        $region73: #{edge_featlayer_3.1} parent=67 // pred_check
          %p592 = pneg %p92
        $region74: #{edge_featlayer_3.1} parent=67 // pred_check_branch
          %594 = sbr.rel (%p592) target = $region76
        $region75: #{edge_featlayer_3.1} parent=67 // pred_region
          %p595 = scmp.lt.s32.totalorder %s37, 1
          %s596 = scalar_select %p595, %s37, 1
          %p597 = scmp.lt.s32.totalorder %s38, 0
          %s598 = scalar_select %p597, %s38, 0
          %s599 = smul.addr %s596, 4
          %s600 = sadd.s32 %s598, %s599
          %s601 = smul.addr %s600, 2
          %s602 = scalar_lea.vmem %s1, %s601
        $region76: #{edge_featlayer_3.1} parent=67 // pred_fallthru
          _
        // Predicated region
        $region77: #{edge_featlayer_3.1} parent=67 // pred_check
          %p603 = pneg %p120
        $region78: #{edge_featlayer_3.1} parent=67 // pred_check_branch
          %605 = sbr.rel (%p603) target = $region80
        $region79: #{edge_featlayer_3.1} parent=67 // pred_region
          %p606 = scmp.lt.s32.totalorder %s37, 1
          %s607 = scalar_select %p606, %s37, 1
          %p608 = scmp.lt.s32.totalorder %s38, 0
          %s609 = scalar_select %p608, %s38, 0
          %s610 = smul.addr %s607, 4
          %s611 = sadd.s32 %s609, %s610
          %s612 = smul.addr %s611, 2
          %s613 = scalar_lea.vmem %s2, %s612
        $region80: #{edge_featlayer_3.1} parent=67 // pred_fallthru
          _
      $region68: #{edge_featlayer_3.1} parent=5 // pred_fallthru
        _
      %p614 = scmp.le.s32.totalorder 1, %s30
      %p615 = scmp.lt.s32.totalorder %s30, 3
      %p616 = pnand %p614, %p615
      %p617 = pneg %p616
      // Predicated region
      $region81: #{edge_featlayer_3.1} parent=5 // pred_check
        _
      $region82: #{edge_featlayer_3.1} parent=5 // pred_check_branch
        %619 = sbr.rel (%p616) target = $region84
      $region83: #{edge_featlayer_3.1} parent=5 // pred_region
        %s620 = ssub.s32 %s30, 1
        // Predicated region
        $region85: #{edge_featlayer_3.1} parent=83 // pred_check
          %p621 = pneg %p147
        $region86: #{edge_featlayer_3.1} parent=83 // pred_check_branch
          %623 = sbr.rel (%p621) target = $region88
        $region87: #{edge_featlayer_3.1} parent=83 // pred_region
          %624 = dma.done [#allocation4], 64
        $region88: #{edge_featlayer_3.1} parent=83 // pred_fallthru
          _
        // Predicated region
        $region89: #{edge_featlayer_3.1} parent=83 // pred_check
          %p625 = pneg %p168
        $region90: #{edge_featlayer_3.1} parent=83 // pred_check_branch
          %627 = sbr.rel (%p625) target = $region92
        $region91: #{edge_featlayer_3.1} parent=83 // pred_region
          %628 = dma.done [#allocation6], 16
        $region92: #{edge_featlayer_3.1} parent=83 // pred_fallthru
          _
        // Predicated region
        $region93: #{edge_featlayer_3.1} parent=83 // pred_check
          %p629 = pneg %p189
        $region94: #{edge_featlayer_3.1} parent=83 // pred_check_branch
          %631 = sbr.rel (%p629) target = $region96
        $region95: #{edge_featlayer_3.1} parent=83 // pred_region
          %632 = dma.done [#allocation6], 16
        $region96: #{edge_featlayer_3.1} parent=83 // pred_fallthru
          _
        // Predicated region
        $region97: #{edge_featlayer_3.1} parent=83 // pred_check
          %p633 = pneg %p210
        $region98: #{edge_featlayer_3.1} parent=83 // pred_check_branch
          %635 = sbr.rel (%p633) target = $region100
        $region99: #{edge_featlayer_3.1} parent=83 // pred_region
          %636 = dma.done [#allocation9], 16
        $region100: #{edge_featlayer_3.1} parent=83 // pred_fallthru
          _
        // Predicated region
        $region101: #{edge_featlayer_3.1} parent=83 // pred_check
          %p637 = pneg %p231
        $region102: #{edge_featlayer_3.1} parent=83 // pred_check_branch
          %639 = sbr.rel (%p637) target = $region104
        $region103: #{edge_featlayer_3.1} parent=83 // pred_region
          %640 = dma.done [#allocation9], 64
        $region104: #{edge_featlayer_3.1} parent=83 // pred_fallthru
          _
        // Predicated region
        $region105: #{edge_featlayer_3.1} parent=83 // pred_check
          %p641 = pneg %p252
        $region106: #{edge_featlayer_3.1} parent=83 // pred_check_branch
          %643 = sbr.rel (%p641) target = $region108
        $region107: #{edge_featlayer_3.1} parent=83 // pred_region
          %644 = dma.done [#allocation12], 16
        $region108: #{edge_featlayer_3.1} parent=83 // pred_fallthru
          _
        // Predicated region
        $region109: #{edge_featlayer_3.1} parent=83 // pred_check
          %p645 = pneg %p273
        $region110: #{edge_featlayer_3.1} parent=83 // pred_check_branch
          %647 = sbr.rel (%p645) target = $region112
        $region111: #{edge_featlayer_3.1} parent=83 // pred_region
          %648 = dma.done [#allocation12], 16
        $region112: #{edge_featlayer_3.1} parent=83 // pred_fallthru
          _
        // Predicated region
        $region113: #{edge_featlayer_3.1} parent=83 // pred_check
          %p649 = pneg %p294
        $region114: #{edge_featlayer_3.1} parent=83 // pred_check_branch
          %651 = sbr.rel (%p649) target = $region116
        $region115: #{edge_featlayer_3.1} parent=83 // pred_region
          %652 = dma.done [#allocation15], 16
        $region116: #{edge_featlayer_3.1} parent=83 // pred_fallthru
          _
        // Predicated region
        $region117: #{edge_featlayer_3.1} parent=83 // pred_check
          %p653 = pneg %p315
        $region118: #{edge_featlayer_3.1} parent=83 // pred_check_branch
          %655 = sbr.rel (%p653) target = $region120
        $region119: #{edge_featlayer_3.1} parent=83 // pred_region
          %656 = dma.done [#allocation15], 64
        $region120: #{edge_featlayer_3.1} parent=83 // pred_fallthru
          _
        // Predicated region
        $region121: #{edge_featlayer_3.1} parent=83 // pred_check
          %p657 = pneg %p336
        $region122: #{edge_featlayer_3.1} parent=83 // pred_check_branch
          %659 = sbr.rel (%p657) target = $region124
        $region123: #{edge_featlayer_3.1} parent=83 // pred_region
          %660 = dma.done [#allocation18], 16
        $region124: #{edge_featlayer_3.1} parent=83 // pred_fallthru
          _
        // Predicated region
        $region125: #{edge_featlayer_3.1} parent=83 // pred_check
          %p661 = pneg %p357
        $region126: #{edge_featlayer_3.1} parent=83 // pred_check_branch
          %663 = sbr.rel (%p661) target = $region128
        $region127: #{edge_featlayer_3.1} parent=83 // pred_region
          %664 = dma.done [#allocation18], 16
        $region128: #{edge_featlayer_3.1} parent=83 // pred_fallthru
          _
        // Predicated region
        $region129: #{edge_featlayer_3.1} parent=83 // pred_check
          %p665 = pneg %p378
        $region130: #{edge_featlayer_3.1} parent=83 // pred_check_branch
          %667 = sbr.rel (%p665) target = $region132
        $region131: #{edge_featlayer_3.1} parent=83 // pred_region
          %668 = dma.done [#allocation21], 16
        $region132: #{edge_featlayer_3.1} parent=83 // pred_fallthru
          _
        %669 = sfence
        %p670 = scmp.lt.s32.totalorder %s39, 1
        %s671 = scalar_select %p670, %s39, 1
        %p672 = scmp.lt.s32.totalorder %s40, 0
        %s673 = scalar_select %p672, %s40, 0
        %s674 = smul.addr %s671, 4
        %s675 = sadd.s32 %s673, %s674
        %s676 = smul.addr %s675, 2
        %s677 = scalar_lea.vmem %s0, %s676
        %p678 = pneg %p70
        %p679 = pneg %p67
        %p680 = scmp.lt.s32.totalorder %s39, 1
        %s681 = scalar_select %p680, %s39, 1
        %p682 = scmp.lt.s32.totalorder %s40, 0
        %s683 = scalar_select %p682, %s40, 0
        %s684 = smul.addr %s681, 4
        %s685 = sadd.s32 %s683, %s684
        %s686 = smul.addr %s685, 2
        %s687 = scalar_lea.vmem %s1, %s686
        %p688 = pneg %p98
        %p689 = pneg %p95
        %p690 = scmp.lt.s32.totalorder %s39, 1
        %s691 = scalar_select %p690, %s39, 1
        %p692 = scmp.lt.s32.totalorder %s40, 0
        %s693 = scalar_select %p692, %s40, 0
        %s694 = smul.addr %s691, 4
        %s695 = sadd.s32 %s693, %s694
        %s696 = smul.addr %s695, 2
        %s697 = scalar_lea.vmem %s2, %s696
        %p698 = pneg %p126
        %p699 = pneg %p123
        %p700 = pneg %p147
        %p701 = pneg %p144
        %p702 = pneg %p168
        %p703 = pneg %p165
        %p704 = pneg %p189
        %p705 = pneg %p186
        %p706 = pneg %p210
        %p707 = pneg %p207
        %p708 = pneg %p231
        %p709 = pneg %p228
        %p710 = pneg %p252
        %p711 = pneg %p249
        %p712 = pneg %p273
        %p713 = pneg %p270
        %p714 = pneg %p294
        %p715 = pneg %p291
        %p716 = pneg %p315
        %p717 = pneg %p312
        %p718 = pneg %p336
        %p719 = pneg %p333
        %p720 = pneg %p357
        %p721 = pneg %p354
        %p722 = pneg %p378
        %p723 = pneg %p375
        %p724 = pneg %p399
        %p725 = pneg %p396
        %p726 = pneg %p427
        %p727 = pneg %p424
        %p728 = scmp.lt.s32.totalorder %s39, 1
        %s729 = scalar_select %p728, %s39, 1
        %p730 = scmp.lt.s32.totalorder %s40, 0
        %s731 = scalar_select %p730, %s40, 0
        %s732 = sadd.s32 %s731, %s729
        %s733 = smul.addr %s732, 2
        %s734 = scalar_lea.vmem %s16, %s733
        %p735 = scmp.lt.s32.totalorder %s39, 1
        %s736 = scalar_select %p735, %s39, 1
        %p737 = scmp.lt.s32.totalorder %s40, 0
        %s738 = scalar_select %p737, %s40, 0
        %s739 = smul.addr %s736, 4
        %s740 = sadd.s32 %s738, %s739
        %s741 = smul.addr %s740, 2
        %s742 = scalar_lea.vmem %s0, %s741
        %p743 = scmp.lt.s32.totalorder %s39, 1
        %s744 = scalar_select %p743, %s39, 1
        %p745 = scmp.lt.s32.totalorder %s40, 0
        %s746 = scalar_select %p745, %s40, 0
        %s747 = smul.addr %s744, 4
        %s748 = sadd.s32 %s746, %s747
        %s749 = smul.addr %s748, 2
        %s750 = scalar_lea.vmem %s1, %s749
        %p751 = scmp.lt.s32.totalorder %s39, 1
        %s752 = scalar_select %p751, %s39, 1
        %p753 = scmp.lt.s32.totalorder %s40, 0
        %s754 = scalar_select %p753, %s40, 0
        %s755 = smul.addr %s752, 4
        %s756 = sadd.s32 %s754, %s755
        %s757 = smul.addr %s756, 2
        %s758 = scalar_lea.vmem %s2, %s757
        %p759 = scmp.lt.s32.totalorder %s39, 1
        %s760 = scalar_select %p759, %s39, 1
        %p761 = scmp.lt.s32.totalorder %s40, 0
        %s762 = scalar_select %p761, %s40, 0
        %s763 = sadd.s32 %s762, %s760
        %s764 = smul.addr %s763, 2
        %s765 = scalar_lea.vmem %s16, %s764
        %s766 = sld [smem:[#allocation2]]
        %v767 = vstv %s766
        %v768 = vld [vmem:[%s742] sm:$0x3]
        %s769 = scalar_lea.vmem %s742, 2
        %v770 = vld [vmem:[%s769] sm:$0x3]
        %s771 = scalar_lea.vmem %s742, 4
        %v772 = vld [vmem:[%s771] sm:$0x3]
        %s773 = scalar_lea.vmem %s742, 6
        %v774 = vld [vmem:[%s773] sm:$0x3]
        %s775 = sld [smem:[#allocation3]]
        %v776 = vstv %s775
        %v777 = vmul.f32 %v768, %v776
        %s778 = sld [smem:[#allocation3 + $0x80]]
        %v779 = vstv %s778
        %v780 = vmul.f32 %v770, %v779
        %v781 = vadd.f32 %v777, %v780
        %s782 = sld [smem:[#allocation3 + $0x100]]
        %v783 = vstv %s782
        %v784 = vmul.f32 %v772, %v783
        %v785 = vadd.f32 %v781, %v784
        %s786 = sld [smem:[#allocation3 + $0x180]]
        %v787 = vstv %s786
        %v788 = vmul.f32 %v774, %v787
        %v789 = vadd.f32 %v785, %v788
        %s790 = sld [smem:[#allocation5]]
        %v791 = vstv %s790
        %v792 = vadd.f32 %v789, %v791
        %vm793 = vcmp.gt.f32.partialorder %v792, 0.0
        %s794 = sld [smem:[#allocation7]]
        %s795 = sld [smem:[#allocation8]]
        %v796 = vstv %s794
        %v797 = vstv %s795
        %v798 = vsel %vm793, %v796, %v797
        %v799 = vmul.f32 %v792, %v798
        %v800 = vadd.f32 %v767, %v799
        %s801 = sld [smem:[#allocation3 + $0x1]]
        %v802 = vstv %s801
        %v803 = vmul.f32 %v768, %v802
        %s804 = sld [smem:[#allocation3 + $0x81]]
        %v805 = vstv %s804
        %v806 = vmul.f32 %v770, %v805
        %v807 = vadd.f32 %v803, %v806
        %s808 = sld [smem:[#allocation3 + $0x101]]
        %v809 = vstv %s808
        %v810 = vmul.f32 %v772, %v809
        %v811 = vadd.f32 %v807, %v810
        %s812 = sld [smem:[#allocation3 + $0x181]]
        %v813 = vstv %s812
        %v814 = vmul.f32 %v774, %v813
        %v815 = vadd.f32 %v811, %v814
        %s816 = sld [smem:[#allocation5 + $0x1]]
        %v817 = vstv %s816
        %v818 = vadd.f32 %v815, %v817
        %vm819 = vcmp.gt.f32.partialorder %v818, 0.0
        %s820 = sld [smem:[#allocation7 + $0x1]]
        %s821 = sld [smem:[#allocation8 + $0x1]]
        %v822 = vstv %s820
        %v823 = vstv %s821
        %v824 = vsel %vm819, %v822, %v823
        %v825 = vmul.f32 %v818, %v824
        %v826 = vadd.f32 %v800, %v825
        %s827 = sld [smem:[#allocation3 + $0x2]]
        %v828 = vstv %s827
        %v829 = vmul.f32 %v768, %v828
        %s830 = sld [smem:[#allocation3 + $0x82]]
        %v831 = vstv %s830
        %v832 = vmul.f32 %v770, %v831
        %v833 = vadd.f32 %v829, %v832
        %s834 = sld [smem:[#allocation3 + $0x102]]
        %v835 = vstv %s834
        %v836 = vmul.f32 %v772, %v835
        %v837 = vadd.f32 %v833, %v836
        %s838 = sld [smem:[#allocation3 + $0x182]]
        %v839 = vstv %s838
        %v840 = vmul.f32 %v774, %v839
        %v841 = vadd.f32 %v837, %v840
        %s842 = sld [smem:[#allocation5 + $0x2]]
        %v843 = vstv %s842
        %v844 = vadd.f32 %v841, %v843
        %vm845 = vcmp.gt.f32.partialorder %v844, 0.0
        %s846 = sld [smem:[#allocation7 + $0x2]]
        %s847 = sld [smem:[#allocation8 + $0x2]]
        %v848 = vstv %s846
        %v849 = vstv %s847
        %v850 = vsel %vm845, %v848, %v849
        %v851 = vmul.f32 %v844, %v850
        %v852 = vadd.f32 %v826, %v851
        %s853 = sld [smem:[#allocation3 + $0x3]]
        %v854 = vstv %s853
        %v855 = vmul.f32 %v768, %v854
        %s856 = sld [smem:[#allocation3 + $0x83]]
        %v857 = vstv %s856
        %v858 = vmul.f32 %v770, %v857
        %v859 = vadd.f32 %v855, %v858
        %s860 = sld [smem:[#allocation3 + $0x103]]
        %v861 = vstv %s860
        %v862 = vmul.f32 %v772, %v861
        %v863 = vadd.f32 %v859, %v862
        %s864 = sld [smem:[#allocation3 + $0x183]]
        %v865 = vstv %s864
        %v866 = vmul.f32 %v774, %v865
        %v867 = vadd.f32 %v863, %v866
        %s868 = sld [smem:[#allocation5 + $0x3]]
        %v869 = vstv %s868
        %v870 = vadd.f32 %v867, %v869
        %vm871 = vcmp.gt.f32.partialorder %v870, 0.0
        %s872 = sld [smem:[#allocation7 + $0x3]]
        %s873 = sld [smem:[#allocation8 + $0x3]]
        %v874 = vstv %s872
        %v875 = vstv %s873
        %v876 = vsel %vm871, %v874, %v875
        %v877 = vmul.f32 %v870, %v876
        %v878 = vadd.f32 %v852, %v877
        %s879 = sld [smem:[#allocation3 + $0x4]]
        %v880 = vstv %s879
        %v881 = vmul.f32 %v768, %v880
        %s882 = sld [smem:[#allocation3 + $0x84]]
        %v883 = vstv %s882
        %v884 = vmul.f32 %v770, %v883
        %v885 = vadd.f32 %v881, %v884
        %s886 = sld [smem:[#allocation3 + $0x104]]
        %v887 = vstv %s886
        %v888 = vmul.f32 %v772, %v887
        %v889 = vadd.f32 %v885, %v888
        %s890 = sld [smem:[#allocation3 + $0x184]]
        %v891 = vstv %s890
        %v892 = vmul.f32 %v774, %v891
        %v893 = vadd.f32 %v889, %v892
        %s894 = sld [smem:[#allocation5 + $0x4]]
        %v895 = vstv %s894
        %v896 = vadd.f32 %v893, %v895
        %vm897 = vcmp.gt.f32.partialorder %v896, 0.0
        %s898 = sld [smem:[#allocation7 + $0x4]]
        %s899 = sld [smem:[#allocation8 + $0x4]]
        %v900 = vstv %s898
        %v901 = vstv %s899
        %v902 = vsel %vm897, %v900, %v901
        %v903 = vmul.f32 %v896, %v902
        %v904 = vadd.f32 %v878, %v903
        %s905 = sld [smem:[#allocation3 + $0x5]]
        %v906 = vstv %s905
        %v907 = vmul.f32 %v768, %v906
        %s908 = sld [smem:[#allocation3 + $0x85]]
        %v909 = vstv %s908
        %v910 = vmul.f32 %v770, %v909
        %v911 = vadd.f32 %v907, %v910
        %s912 = sld [smem:[#allocation3 + $0x105]]
        %v913 = vstv %s912
        %v914 = vmul.f32 %v772, %v913
        %v915 = vadd.f32 %v911, %v914
        %s916 = sld [smem:[#allocation3 + $0x185]]
        %v917 = vstv %s916
        %v918 = vmul.f32 %v774, %v917
        %v919 = vadd.f32 %v915, %v918
        %s920 = sld [smem:[#allocation5 + $0x5]]
        %v921 = vstv %s920
        %v922 = vadd.f32 %v919, %v921
        %vm923 = vcmp.gt.f32.partialorder %v922, 0.0
        %s924 = sld [smem:[#allocation7 + $0x5]]
        %s925 = sld [smem:[#allocation8 + $0x5]]
        %v926 = vstv %s924
        %v927 = vstv %s925
        %v928 = vsel %vm923, %v926, %v927
        %v929 = vmul.f32 %v922, %v928
        %v930 = vadd.f32 %v904, %v929
        %s931 = sld [smem:[#allocation3 + $0x6]]
        %v932 = vstv %s931
        %v933 = vmul.f32 %v768, %v932
        %s934 = sld [smem:[#allocation3 + $0x86]]
        %v935 = vstv %s934
        %v936 = vmul.f32 %v770, %v935
        %v937 = vadd.f32 %v933, %v936
        %s938 = sld [smem:[#allocation3 + $0x106]]
        %v939 = vstv %s938
        %v940 = vmul.f32 %v772, %v939
        %v941 = vadd.f32 %v937, %v940
        %s942 = sld [smem:[#allocation3 + $0x186]]
        %v943 = vstv %s942
        %v944 = vmul.f32 %v774, %v943
        %v945 = vadd.f32 %v941, %v944
        %s946 = sld [smem:[#allocation5 + $0x6]]
        %v947 = vstv %s946
        %v948 = vadd.f32 %v945, %v947
        %vm949 = vcmp.gt.f32.partialorder %v948, 0.0
        %s950 = sld [smem:[#allocation7 + $0x6]]
        %s951 = sld [smem:[#allocation8 + $0x6]]
        %v952 = vstv %s950
        %v953 = vstv %s951
        %v954 = vsel %vm949, %v952, %v953
        %v955 = vmul.f32 %v948, %v954
        %v956 = vadd.f32 %v930, %v955
        %s957 = sld [smem:[#allocation3 + $0x7]]
        %v958 = vstv %s957
        %v959 = vmul.f32 %v768, %v958
        %s960 = sld [smem:[#allocation3 + $0x87]]
        %v961 = vstv %s960
        %v962 = vmul.f32 %v770, %v961
        %v963 = vadd.f32 %v959, %v962
        %s964 = sld [smem:[#allocation3 + $0x107]]
        %v965 = vstv %s964
        %v966 = vmul.f32 %v772, %v965
        %v967 = vadd.f32 %v963, %v966
        %s968 = sld [smem:[#allocation3 + $0x187]]
        %v969 = vstv %s968
        %v970 = vmul.f32 %v774, %v969
        %v971 = vadd.f32 %v967, %v970
        %s972 = sld [smem:[#allocation5 + $0x7]]
        %v973 = vstv %s972
        %v974 = vadd.f32 %v971, %v973
        %vm975 = vcmp.gt.f32.partialorder %v974, 0.0
        %s976 = sld [smem:[#allocation7 + $0x7]]
        %s977 = sld [smem:[#allocation8 + $0x7]]
        %v978 = vstv %s976
        %v979 = vstv %s977
        %v980 = vsel %vm975, %v978, %v979
        %v981 = vmul.f32 %v974, %v980
        %v982 = vadd.f32 %v956, %v981
        %v983 = vld [vmem:[%s750] sm:$0x3]
        %s984 = scalar_lea.vmem %s750, 2
        %v985 = vld [vmem:[%s984] sm:$0x3]
        %s986 = scalar_lea.vmem %s750, 4
        %v987 = vld [vmem:[%s986] sm:$0x3]
        %s988 = scalar_lea.vmem %s750, 6
        %v989 = vld [vmem:[%s988] sm:$0x3]
        %s990 = sld [smem:[#allocation10]]
        %v991 = vstv %s990
        %v992 = vmul.f32 %v983, %v991
        %s993 = sld [smem:[#allocation10 + $0x80]]
        %v994 = vstv %s993
        %v995 = vmul.f32 %v985, %v994
        %v996 = vadd.f32 %v992, %v995
        %s997 = sld [smem:[#allocation10 + $0x100]]
        %v998 = vstv %s997
        %v999 = vmul.f32 %v987, %v998
        %v1000 = vadd.f32 %v996, %v999
        %s1001 = sld [smem:[#allocation10 + $0x180]]
        %v1002 = vstv %s1001
        %v1003 = vmul.f32 %v989, %v1002
        %v1004 = vadd.f32 %v1000, %v1003
        %s1005 = sld [smem:[#allocation11]]
        %v1006 = vstv %s1005
        %v1007 = vadd.f32 %v1004, %v1006
        %vm1008 = vcmp.gt.f32.partialorder %v1007, 0.0
        %s1009 = sld [smem:[#allocation13]]
        %s1010 = sld [smem:[#allocation14]]
        %v1011 = vstv %s1009
        %v1012 = vstv %s1010
        %v1013 = vsel %vm1008, %v1011, %v1012
        %v1014 = vmul.f32 %v1007, %v1013
        %v1015 = vadd.f32 %v982, %v1014
        %s1016 = sld [smem:[#allocation10 + $0x1]]
        %v1017 = vstv %s1016
        %v1018 = vmul.f32 %v983, %v1017
        %s1019 = sld [smem:[#allocation10 + $0x81]]
        %v1020 = vstv %s1019
        %v1021 = vmul.f32 %v985, %v1020
        %v1022 = vadd.f32 %v1018, %v1021
        %s1023 = sld [smem:[#allocation10 + $0x101]]
        %v1024 = vstv %s1023
        %v1025 = vmul.f32 %v987, %v1024
        %v1026 = vadd.f32 %v1022, %v1025
        %s1027 = sld [smem:[#allocation10 + $0x181]]
        %v1028 = vstv %s1027
        %v1029 = vmul.f32 %v989, %v1028
        %v1030 = vadd.f32 %v1026, %v1029
        %s1031 = sld [smem:[#allocation11 + $0x1]]
        %v1032 = vstv %s1031
        %v1033 = vadd.f32 %v1030, %v1032
        %vm1034 = vcmp.gt.f32.partialorder %v1033, 0.0
        %s1035 = sld [smem:[#allocation13 + $0x1]]
        %s1036 = sld [smem:[#allocation14 + $0x1]]
        %v1037 = vstv %s1035
        %v1038 = vstv %s1036
        %v1039 = vsel %vm1034, %v1037, %v1038
        %v1040 = vmul.f32 %v1033, %v1039
        %v1041 = vadd.f32 %v1015, %v1040
        %s1042 = sld [smem:[#allocation10 + $0x2]]
        %v1043 = vstv %s1042
        %v1044 = vmul.f32 %v983, %v1043
        %s1045 = sld [smem:[#allocation10 + $0x82]]
        %v1046 = vstv %s1045
        %v1047 = vmul.f32 %v985, %v1046
        %v1048 = vadd.f32 %v1044, %v1047
        %s1049 = sld [smem:[#allocation10 + $0x102]]
        %v1050 = vstv %s1049
        %v1051 = vmul.f32 %v987, %v1050
        %v1052 = vadd.f32 %v1048, %v1051
        %s1053 = sld [smem:[#allocation10 + $0x182]]
        %v1054 = vstv %s1053
        %v1055 = vmul.f32 %v989, %v1054
        %v1056 = vadd.f32 %v1052, %v1055
        %s1057 = sld [smem:[#allocation11 + $0x2]]
        %v1058 = vstv %s1057
        %v1059 = vadd.f32 %v1056, %v1058
        %vm1060 = vcmp.gt.f32.partialorder %v1059, 0.0
        %s1061 = sld [smem:[#allocation13 + $0x2]]
        %s1062 = sld [smem:[#allocation14 + $0x2]]
        %v1063 = vstv %s1061
        %v1064 = vstv %s1062
        %v1065 = vsel %vm1060, %v1063, %v1064
        %v1066 = vmul.f32 %v1059, %v1065
        %v1067 = vadd.f32 %v1041, %v1066
        %s1068 = sld [smem:[#allocation10 + $0x3]]
        %v1069 = vstv %s1068
        %v1070 = vmul.f32 %v983, %v1069
        %s1071 = sld [smem:[#allocation10 + $0x83]]
        %v1072 = vstv %s1071
        %v1073 = vmul.f32 %v985, %v1072
        %v1074 = vadd.f32 %v1070, %v1073
        %s1075 = sld [smem:[#allocation10 + $0x103]]
        %v1076 = vstv %s1075
        %v1077 = vmul.f32 %v987, %v1076
        %v1078 = vadd.f32 %v1074, %v1077
        %s1079 = sld [smem:[#allocation10 + $0x183]]
        %v1080 = vstv %s1079
        %v1081 = vmul.f32 %v989, %v1080
        %v1082 = vadd.f32 %v1078, %v1081
        %s1083 = sld [smem:[#allocation11 + $0x3]]
        %v1084 = vstv %s1083
        %v1085 = vadd.f32 %v1082, %v1084
        %vm1086 = vcmp.gt.f32.partialorder %v1085, 0.0
        %s1087 = sld [smem:[#allocation13 + $0x3]]
        %s1088 = sld [smem:[#allocation14 + $0x3]]
        %v1089 = vstv %s1087
        %v1090 = vstv %s1088
        %v1091 = vsel %vm1086, %v1089, %v1090
        %v1092 = vmul.f32 %v1085, %v1091
        %v1093 = vadd.f32 %v1067, %v1092
        %s1094 = sld [smem:[#allocation10 + $0x4]]
        %v1095 = vstv %s1094
        %v1096 = vmul.f32 %v983, %v1095
        %s1097 = sld [smem:[#allocation10 + $0x84]]
        %v1098 = vstv %s1097
        %v1099 = vmul.f32 %v985, %v1098
        %v1100 = vadd.f32 %v1096, %v1099
        %s1101 = sld [smem:[#allocation10 + $0x104]]
        %v1102 = vstv %s1101
        %v1103 = vmul.f32 %v987, %v1102
        %v1104 = vadd.f32 %v1100, %v1103
        %s1105 = sld [smem:[#allocation10 + $0x184]]
        %v1106 = vstv %s1105
        %v1107 = vmul.f32 %v989, %v1106
        %v1108 = vadd.f32 %v1104, %v1107
        %s1109 = sld [smem:[#allocation11 + $0x4]]
        %v1110 = vstv %s1109
        %v1111 = vadd.f32 %v1108, %v1110
        %vm1112 = vcmp.gt.f32.partialorder %v1111, 0.0
        %s1113 = sld [smem:[#allocation13 + $0x4]]
        %s1114 = sld [smem:[#allocation14 + $0x4]]
        %v1115 = vstv %s1113
        %v1116 = vstv %s1114
        %v1117 = vsel %vm1112, %v1115, %v1116
        %v1118 = vmul.f32 %v1111, %v1117
        %v1119 = vadd.f32 %v1093, %v1118
        %s1120 = sld [smem:[#allocation10 + $0x5]]
        %v1121 = vstv %s1120
        %v1122 = vmul.f32 %v983, %v1121
        %s1123 = sld [smem:[#allocation10 + $0x85]]
        %v1124 = vstv %s1123
        %v1125 = vmul.f32 %v985, %v1124
        %v1126 = vadd.f32 %v1122, %v1125
        %s1127 = sld [smem:[#allocation10 + $0x105]]
        %v1128 = vstv %s1127
        %v1129 = vmul.f32 %v987, %v1128
        %v1130 = vadd.f32 %v1126, %v1129
        %s1131 = sld [smem:[#allocation10 + $0x185]]
        %v1132 = vstv %s1131
        %v1133 = vmul.f32 %v989, %v1132
        %v1134 = vadd.f32 %v1130, %v1133
        %s1135 = sld [smem:[#allocation11 + $0x5]]
        %v1136 = vstv %s1135
        %v1137 = vadd.f32 %v1134, %v1136
        %vm1138 = vcmp.gt.f32.partialorder %v1137, 0.0
        %s1139 = sld [smem:[#allocation13 + $0x5]]
        %s1140 = sld [smem:[#allocation14 + $0x5]]
        %v1141 = vstv %s1139
        %v1142 = vstv %s1140
        %v1143 = vsel %vm1138, %v1141, %v1142
        %v1144 = vmul.f32 %v1137, %v1143
        %v1145 = vadd.f32 %v1119, %v1144
        %s1146 = sld [smem:[#allocation10 + $0x6]]
        %v1147 = vstv %s1146
        %v1148 = vmul.f32 %v983, %v1147
        %s1149 = sld [smem:[#allocation10 + $0x86]]
        %v1150 = vstv %s1149
        %v1151 = vmul.f32 %v985, %v1150
        %v1152 = vadd.f32 %v1148, %v1151
        %s1153 = sld [smem:[#allocation10 + $0x106]]
        %v1154 = vstv %s1153
        %v1155 = vmul.f32 %v987, %v1154
        %v1156 = vadd.f32 %v1152, %v1155
        %s1157 = sld [smem:[#allocation10 + $0x186]]
        %v1158 = vstv %s1157
        %v1159 = vmul.f32 %v989, %v1158
        %v1160 = vadd.f32 %v1156, %v1159
        %s1161 = sld [smem:[#allocation11 + $0x6]]
        %v1162 = vstv %s1161
        %v1163 = vadd.f32 %v1160, %v1162
        %vm1164 = vcmp.gt.f32.partialorder %v1163, 0.0
        %s1165 = sld [smem:[#allocation13 + $0x6]]
        %s1166 = sld [smem:[#allocation14 + $0x6]]
        %v1167 = vstv %s1165
        %v1168 = vstv %s1166
        %v1169 = vsel %vm1164, %v1167, %v1168
        %v1170 = vmul.f32 %v1163, %v1169
        %v1171 = vadd.f32 %v1145, %v1170
        %s1172 = sld [smem:[#allocation10 + $0x7]]
        %v1173 = vstv %s1172
        %v1174 = vmul.f32 %v983, %v1173
        %s1175 = sld [smem:[#allocation10 + $0x87]]
        %v1176 = vstv %s1175
        %v1177 = vmul.f32 %v985, %v1176
        %v1178 = vadd.f32 %v1174, %v1177
        %s1179 = sld [smem:[#allocation10 + $0x107]]
        %v1180 = vstv %s1179
        %v1181 = vmul.f32 %v987, %v1180
        %v1182 = vadd.f32 %v1178, %v1181
        %s1183 = sld [smem:[#allocation10 + $0x187]]
        %v1184 = vstv %s1183
        %v1185 = vmul.f32 %v989, %v1184
        %v1186 = vadd.f32 %v1182, %v1185
        %s1187 = sld [smem:[#allocation11 + $0x7]]
        %v1188 = vstv %s1187
        %v1189 = vadd.f32 %v1186, %v1188
        %vm1190 = vcmp.gt.f32.partialorder %v1189, 0.0
        %s1191 = sld [smem:[#allocation13 + $0x7]]
        %s1192 = sld [smem:[#allocation14 + $0x7]]
        %v1193 = vstv %s1191
        %v1194 = vstv %s1192
        %v1195 = vsel %vm1190, %v1193, %v1194
        %v1196 = vmul.f32 %v1189, %v1195
        %v1197 = vadd.f32 %v1171, %v1196
        %v1198 = vld [vmem:[%s758] sm:$0x3]
        %s1199 = scalar_lea.vmem %s758, 2
        %v1200 = vld [vmem:[%s1199] sm:$0x3]
        %s1201 = scalar_lea.vmem %s758, 4
        %v1202 = vld [vmem:[%s1201] sm:$0x3]
        %s1203 = scalar_lea.vmem %s758, 6
        %v1204 = vld [vmem:[%s1203] sm:$0x3]
        %s1205 = sld [smem:[#allocation16]]
        %v1206 = vstv %s1205
        %v1207 = vmul.f32 %v1198, %v1206
        %s1208 = sld [smem:[#allocation16 + $0x80]]
        %v1209 = vstv %s1208
        %v1210 = vmul.f32 %v1200, %v1209
        %v1211 = vadd.f32 %v1207, %v1210
        %s1212 = sld [smem:[#allocation16 + $0x100]]
        %v1213 = vstv %s1212
        %v1214 = vmul.f32 %v1202, %v1213
        %v1215 = vadd.f32 %v1211, %v1214
        %s1216 = sld [smem:[#allocation16 + $0x180]]
        %v1217 = vstv %s1216
        %v1218 = vmul.f32 %v1204, %v1217
        %v1219 = vadd.f32 %v1215, %v1218
        %s1220 = sld [smem:[#allocation17]]
        %v1221 = vstv %s1220
        %v1222 = vadd.f32 %v1219, %v1221
        %vm1223 = vcmp.gt.f32.partialorder %v1222, 0.0
        %s1224 = sld [smem:[#allocation19]]
        %s1225 = sld [smem:[#allocation20]]
        %v1226 = vstv %s1224
        %v1227 = vstv %s1225
        %v1228 = vsel %vm1223, %v1226, %v1227
        %v1229 = vmul.f32 %v1222, %v1228
        %v1230 = vadd.f32 %v1197, %v1229
        %s1231 = sld [smem:[#allocation16 + $0x1]]
        %v1232 = vstv %s1231
        %v1233 = vmul.f32 %v1198, %v1232
        %s1234 = sld [smem:[#allocation16 + $0x81]]
        %v1235 = vstv %s1234
        %v1236 = vmul.f32 %v1200, %v1235
        %v1237 = vadd.f32 %v1233, %v1236
        %s1238 = sld [smem:[#allocation16 + $0x101]]
        %v1239 = vstv %s1238
        %v1240 = vmul.f32 %v1202, %v1239
        %v1241 = vadd.f32 %v1237, %v1240
        %s1242 = sld [smem:[#allocation16 + $0x181]]
        %v1243 = vstv %s1242
        %v1244 = vmul.f32 %v1204, %v1243
        %v1245 = vadd.f32 %v1241, %v1244
        %s1246 = sld [smem:[#allocation17 + $0x1]]
        %v1247 = vstv %s1246
        %v1248 = vadd.f32 %v1245, %v1247
        %vm1249 = vcmp.gt.f32.partialorder %v1248, 0.0
        %s1250 = sld [smem:[#allocation19 + $0x1]]
        %s1251 = sld [smem:[#allocation20 + $0x1]]
        %v1252 = vstv %s1250
        %v1253 = vstv %s1251
        %v1254 = vsel %vm1249, %v1252, %v1253
        %v1255 = vmul.f32 %v1248, %v1254
        %v1256 = vadd.f32 %v1230, %v1255
        %s1257 = sld [smem:[#allocation16 + $0x2]]
        %v1258 = vstv %s1257
        %v1259 = vmul.f32 %v1198, %v1258
        %s1260 = sld [smem:[#allocation16 + $0x82]]
        %v1261 = vstv %s1260
        %v1262 = vmul.f32 %v1200, %v1261
        %v1263 = vadd.f32 %v1259, %v1262
        %s1264 = sld [smem:[#allocation16 + $0x102]]
        %v1265 = vstv %s1264
        %v1266 = vmul.f32 %v1202, %v1265
        %v1267 = vadd.f32 %v1263, %v1266
        %s1268 = sld [smem:[#allocation16 + $0x182]]
        %v1269 = vstv %s1268
        %v1270 = vmul.f32 %v1204, %v1269
        %v1271 = vadd.f32 %v1267, %v1270
        %s1272 = sld [smem:[#allocation17 + $0x2]]
        %v1273 = vstv %s1272
        %v1274 = vadd.f32 %v1271, %v1273
        %vm1275 = vcmp.gt.f32.partialorder %v1274, 0.0
        %s1276 = sld [smem:[#allocation19 + $0x2]]
        %s1277 = sld [smem:[#allocation20 + $0x2]]
        %v1278 = vstv %s1276
        %v1279 = vstv %s1277
        %v1280 = vsel %vm1275, %v1278, %v1279
        %v1281 = vmul.f32 %v1274, %v1280
        %v1282 = vadd.f32 %v1256, %v1281
        %s1283 = sld [smem:[#allocation16 + $0x3]]
        %v1284 = vstv %s1283
        %v1285 = vmul.f32 %v1198, %v1284
        %s1286 = sld [smem:[#allocation16 + $0x83]]
        %v1287 = vstv %s1286
        %v1288 = vmul.f32 %v1200, %v1287
        %v1289 = vadd.f32 %v1285, %v1288
        %s1290 = sld [smem:[#allocation16 + $0x103]]
        %v1291 = vstv %s1290
        %v1292 = vmul.f32 %v1202, %v1291
        %v1293 = vadd.f32 %v1289, %v1292
        %s1294 = sld [smem:[#allocation16 + $0x183]]
        %v1295 = vstv %s1294
        %v1296 = vmul.f32 %v1204, %v1295
        %v1297 = vadd.f32 %v1293, %v1296
        %s1298 = sld [smem:[#allocation17 + $0x3]]
        %v1299 = vstv %s1298
        %v1300 = vadd.f32 %v1297, %v1299
        %vm1301 = vcmp.gt.f32.partialorder %v1300, 0.0
        %s1302 = sld [smem:[#allocation19 + $0x3]]
        %s1303 = sld [smem:[#allocation20 + $0x3]]
        %v1304 = vstv %s1302
        %v1305 = vstv %s1303
        %v1306 = vsel %vm1301, %v1304, %v1305
        %v1307 = vmul.f32 %v1300, %v1306
        %v1308 = vadd.f32 %v1282, %v1307
        %s1309 = sld [smem:[#allocation16 + $0x4]]
        %v1310 = vstv %s1309
        %v1311 = vmul.f32 %v1198, %v1310
        %s1312 = sld [smem:[#allocation16 + $0x84]]
        %v1313 = vstv %s1312
        %v1314 = vmul.f32 %v1200, %v1313
        %v1315 = vadd.f32 %v1311, %v1314
        %s1316 = sld [smem:[#allocation16 + $0x104]]
        %v1317 = vstv %s1316
        %v1318 = vmul.f32 %v1202, %v1317
        %v1319 = vadd.f32 %v1315, %v1318
        %s1320 = sld [smem:[#allocation16 + $0x184]]
        %v1321 = vstv %s1320
        %v1322 = vmul.f32 %v1204, %v1321
        %v1323 = vadd.f32 %v1319, %v1322
        %s1324 = sld [smem:[#allocation17 + $0x4]]
        %v1325 = vstv %s1324
        %v1326 = vadd.f32 %v1323, %v1325
        %vm1327 = vcmp.gt.f32.partialorder %v1326, 0.0
        %s1328 = sld [smem:[#allocation19 + $0x4]]
        %s1329 = sld [smem:[#allocation20 + $0x4]]
        %v1330 = vstv %s1328
        %v1331 = vstv %s1329
        %v1332 = vsel %vm1327, %v1330, %v1331
        %v1333 = vmul.f32 %v1326, %v1332
        %v1334 = vadd.f32 %v1308, %v1333
        %s1335 = sld [smem:[#allocation16 + $0x5]]
        %v1336 = vstv %s1335
        %v1337 = vmul.f32 %v1198, %v1336
        %s1338 = sld [smem:[#allocation16 + $0x85]]
        %v1339 = vstv %s1338
        %v1340 = vmul.f32 %v1200, %v1339
        %v1341 = vadd.f32 %v1337, %v1340
        %s1342 = sld [smem:[#allocation16 + $0x105]]
        %v1343 = vstv %s1342
        %v1344 = vmul.f32 %v1202, %v1343
        %v1345 = vadd.f32 %v1341, %v1344
        %s1346 = sld [smem:[#allocation16 + $0x185]]
        %v1347 = vstv %s1346
        %v1348 = vmul.f32 %v1204, %v1347
        %v1349 = vadd.f32 %v1345, %v1348
        %s1350 = sld [smem:[#allocation17 + $0x5]]
        %v1351 = vstv %s1350
        %v1352 = vadd.f32 %v1349, %v1351
        %vm1353 = vcmp.gt.f32.partialorder %v1352, 0.0
        %s1354 = sld [smem:[#allocation19 + $0x5]]
        %s1355 = sld [smem:[#allocation20 + $0x5]]
        %v1356 = vstv %s1354
        %v1357 = vstv %s1355
        %v1358 = vsel %vm1353, %v1356, %v1357
        %v1359 = vmul.f32 %v1352, %v1358
        %v1360 = vadd.f32 %v1334, %v1359
        %s1361 = sld [smem:[#allocation16 + $0x6]]
        %v1362 = vstv %s1361
        %v1363 = vmul.f32 %v1198, %v1362
        %s1364 = sld [smem:[#allocation16 + $0x86]]
        %v1365 = vstv %s1364
        %v1366 = vmul.f32 %v1200, %v1365
        %v1367 = vadd.f32 %v1363, %v1366
        %s1368 = sld [smem:[#allocation16 + $0x106]]
        %v1369 = vstv %s1368
        %v1370 = vmul.f32 %v1202, %v1369
        %v1371 = vadd.f32 %v1367, %v1370
        %s1372 = sld [smem:[#allocation16 + $0x186]]
        %v1373 = vstv %s1372
        %v1374 = vmul.f32 %v1204, %v1373
        %v1375 = vadd.f32 %v1371, %v1374
        %s1376 = sld [smem:[#allocation17 + $0x6]]
        %v1377 = vstv %s1376
        %v1378 = vadd.f32 %v1375, %v1377
        %vm1379 = vcmp.gt.f32.partialorder %v1378, 0.0
        %s1380 = sld [smem:[#allocation19 + $0x6]]
        %s1381 = sld [smem:[#allocation20 + $0x6]]
        %v1382 = vstv %s1380
        %v1383 = vstv %s1381
        %v1384 = vsel %vm1379, %v1382, %v1383
        %v1385 = vmul.f32 %v1378, %v1384
        %v1386 = vadd.f32 %v1360, %v1385
        %s1387 = sld [smem:[#allocation16 + $0x7]]
        %v1388 = vstv %s1387
        %v1389 = vmul.f32 %v1198, %v1388
        %s1390 = sld [smem:[#allocation16 + $0x87]]
        %v1391 = vstv %s1390
        %v1392 = vmul.f32 %v1200, %v1391
        %v1393 = vadd.f32 %v1389, %v1392
        %s1394 = sld [smem:[#allocation16 + $0x107]]
        %v1395 = vstv %s1394
        %v1396 = vmul.f32 %v1202, %v1395
        %v1397 = vadd.f32 %v1393, %v1396
        %s1398 = sld [smem:[#allocation16 + $0x187]]
        %v1399 = vstv %s1398
        %v1400 = vmul.f32 %v1204, %v1399
        %v1401 = vadd.f32 %v1397, %v1400
        %s1402 = sld [smem:[#allocation17 + $0x7]]
        %v1403 = vstv %s1402
        %v1404 = vadd.f32 %v1401, %v1403
        %vm1405 = vcmp.gt.f32.partialorder %v1404, 0.0
        %s1406 = sld [smem:[#allocation19 + $0x7]]
        %s1407 = sld [smem:[#allocation20 + $0x7]]
        %v1408 = vstv %s1406
        %v1409 = vstv %s1407
        %v1410 = vsel %vm1405, %v1408, %v1409
        %v1411 = vmul.f32 %v1404, %v1410
        %v1412 = vadd.f32 %v1386, %v1411
        %1413 = vst [vmem:[%s765] sm:$0x3] %v1412
        %p1414 = scmp.lt.s32.totalorder %s39, 1
        %s1415 = scalar_select %p1414, %s39, 1
        %p1416 = scmp.lt.s32.totalorder %s40, 0
        %s1417 = scalar_select %p1416, %s40, 0
        %s1418 = sadd.s32 %s1417, %s1415
        %s1419 = smul.addr %s1418, 2
        %s1420 = scalar_lea.vmem %s16, %s1419
        // Predicated region
        $region133: #{edge_featlayer_3.1} parent=83 // pred_check
          %p1421 = pneg %p424
        $region134: #{edge_featlayer_3.1} parent=83 // pred_check_branch
          %1423 = sbr.rel (%p1421) target = $region136
        $region135: #{edge_featlayer_3.1} parent=83 // pred_region
          _
        $region136: #{edge_featlayer_3.1} parent=83 // pred_fallthru
          _
      $region84: #{edge_featlayer_3.1} parent=5 // pred_fallthru
        _
      %p1424 = scmp.le.s32.totalorder 2, %s30
      // Predicated region
      $region137: #{edge_featlayer_3.1} parent=5 // pred_check
        %p1425 = pneg %p1424
      $region138: #{edge_featlayer_3.1} parent=5 // pred_check_branch
        %1427 = sbr.rel (%p1425) target = $region140
      $region139: #{edge_featlayer_3.1} parent=5 // pred_region
        %s1428 = ssub.s32 %s30, 2
        // Predicated region
        $region141: #{edge_featlayer_3.1} parent=139 // pred_check
          %p1429 = pneg %p430
        $region142: #{edge_featlayer_3.1} parent=139 // pred_check_branch
          %1431 = sbr.rel (%p1429) target = $region144
        $region143: #{edge_featlayer_3.1} parent=139 // pred_region
          %p1432 = scmp.lt.s32.totalorder %s41, 1
          %s1433 = scalar_select %p1432, %s41, 1
          %p1434 = scmp.lt.s32.totalorder %s42, 0
          %s1435 = scalar_select %p1434, %s42, 0
          %s1436 = sadd.s32 %s1435, %s1433
          %s1437 = smul.addr %s1436, 2
          %s1438 = scalar_lea.vmem %s16, %s1437
        $region144: #{edge_featlayer_3.1} parent=139 // pred_fallthru
          _
      $region140: #{edge_featlayer_3.1} parent=5 // pred_fallthru
        _
    $region6: #{edge_featlayer_3.1} parent=1 // loop_footer
      %s34 = sadd.s32 1, %s30
    $region7: #{edge_featlayer_3.1} parent=1 // loop_footer_branch
      %29 = sbr.rel target = $region3
    $region8: #{edge_featlayer_3.1} parent=1 // loop_exit
      _
    %1439 = vsyncpa [#allocation4], 1
    %s1440 = scalar_lea.sflag [#allocation4], 1
    %1441 = vsyncpa %s1440, 1
    %1442 = vsyncpa [#allocation6], 1
    %1443 = vsyncpa [#allocation9], 1
    %1444 = vsyncpa [#allocation12], 1
    %1445 = vsyncpa [#allocation15], 1
    %1446 = vsyncpa [#allocation18], 1
    %1447 = vsyncpa [#allocation21], 1

</llo_original>
